<compile_context>
chip_gen: v7x
topology: tpu7x:2x2x1
jax: 0.10.0
libtpu: 0.0.40
codegen_flags: <defaults>
</compile_context>

<pallas_src>
import functools
import math

import jax
import jax.numpy as jnp
from jax.experimental import pallas as pl
from jax.experimental.pallas import tpu as pltpu

LANE = 128
NUM_LAYERS = 3

# ---- static slab indices -----------------------------------------------------
# weight slab (bf16, each entry zero-padded to (128, 128)); GIN layer l uses
# entries 2*l (first linear, BN folded) and 2*l+1 (second linear).
W_A1, W_B1, W_A2, W_B2, W_A3, W_B3, W_M1, W_M2 = range(8)            # graph
W_Q, W_O, W_F1, W_F2 = range(8, 12)                                   # text
NUM_W = 12
# vector slab (f32, each entry zero-padded to (128,))
V_A1, V_B1, V_A2, V_B2, V_A3, V_B3, V_M1, V_M2 = range(8)             # graph
V_Q, V_O, V_G1, V_BE1, V_F1, V_F2, V_G2, V_BE2 = range(8, 16)         # text
NUM_V = 16


# ------------------------------------------------------------------------------
# Fused kernel.  Grid = (layer, node_tile), both sequential ("arbitrary"):
#   - layer axis is a true dependency chain (GIN conv l+1 reads all of conv l),
#   - the node-tile axis reads the FULL previous-layer h from core-private
#     scratch, so it cannot be sharded across cores without shared memory.
# ------------------------------------------------------------------------------
def _fused_kernel(a_ref, x_ref, p_ref, xt_ref, mb_ref, w_ref, v_ref,
                  wkv_ref, bkv_ref, gout_ref, tout_ref, h_buf, *, d_model):
    f32 = jnp.float32
    bf16 = jnp.bfloat16

    layer = pl.program_id(0)
    tile = pl.program_id(1)
    n_tiles = pl.num_programs(1)
    tn = a_ref.shape[0]

    def vec(i):                       # (1, 128) f32 bias / LN vector (static idx)
        return v_ref[i:i + 1, :]

    def dotw(act, i):                 # bf16 MXU matmul, f32 accumulation
        return jnp.dot(act.astype(bf16), w_ref[i], preferred_element_type=f32)

    def ln_pad(v, gi, bi):
        # LayerNorm over the real d_model lanes; lanes >= d_model are zero so
        # sum / sum-of-squares are exact and zero-padded gamma/beta keep them 0.
        mu = jnp.sum(v, axis=-1, keepdims=True) * (1.0 / d_model)
        ms = jnp.sum(v * v, axis=-1, keepdims=True) * (1.0 / d_model)
        var = ms - mu * mu
        return (v - mu) * jax.lax.rsqrt(var + 1e-5) * vec(gi) + vec(bi)

    # -------- first grid step: seed layer-0 activations + text encoder --------
    @pl.when((layer == 0) & (tile == 0))
    def _():
        h_buf[0] = x_ref[...]                         # (N, 128) bf16 node features

        # Text encoder (CLS row only), runs exactly once.
        # TODO(synk): real module uses AutoModel.from_pretrained(model_name);
        # pretrained weights cannot be reproduced -> deterministic stand-in with
        # the same (input_ids, attention_mask) -> [:, 0, :] interface.
        xt = xt_ref[...]                              # (B, Lp, 128) f32
        B, Lp, DP = xt.shape
        x2 = xt.reshape(B * Lp, DP)

        # fused K|V projection: one (B*Lp,128)@(128,256) matmul (256-wide MXU)
        kv = jnp.dot(x2.astype(bf16), wkv_ref[...],
                     preferred_element_type=f32) + bkv_ref[...]
        k3 = kv[:, :DP].reshape(B, Lp, DP)
        v3 = kv[:, DP:].reshape(B, Lp, DP)

        x_cls = xt[:, 0, :]                           # only CLS row needs Q / FFN
        q3 = (dotw(x_cls, W_Q) + vec(V_Q)).reshape(B, 1, DP)

        scores = jnp.einsum('bqd,bld->bql', q3, k3,
                            preferred_element_type=f32) * (1.0 / math.sqrt(d_model))
        # -1e9 additive mask; safe because of the max-subtraction below.
        scores = scores + mb_ref[...]
        scores = scores - jnp.max(scores, axis=-1, keepdims=True)
        e = jnp.exp(scores)
        attn = e * pl.reciprocal(jnp.sum(e, axis=-1, keepdims=True), approx=True)
        ctx = jnp.einsum('bql,bld->bqd', attn, v3,
                         preferred_element_type=f32).reshape(B, DP)

        o = dotw(ctx, W_O) + vec(V_O)
        h1 = ln_pad(x_cls + o, V_G1, V_BE1)
        f = dotw(h1, W_F1) + vec(V_F1)
        # TODO(synk): tanh-approx GELU; PyTorch nn.GELU default is the erf form.
        f = 0.5 * f * (1.0 + jnp.tanh(0.7978845608028654
                                      * (f + 0.044715 * f * f * f)))
        f2 = dotw(f, W_F2) + vec(V_F2)
        tout_ref[...] = ln_pad(h1 + f2, V_G2, V_BE2)

    # -------- graph encoder: one (layer, node-tile) GIN step ------------------
    # ping-pong: layer l reads h_buf[l % 2], writes h_buf[1 - l % 2]
    src = layer % 2
    dst = 1 - src

    # GINConv (eps=0): aggregate = (A + I)_tile @ h_prev
    agg = jnp.dot(a_ref[...], h_buf[src], preferred_element_type=f32)   # (tn,128)

    wa = w_ref[2 * layer]                       # per-layer weights (dynamic index)
    wb = w_ref[2 * layer + 1]
    ba = v_ref[pl.ds(2 * layer, 1), :]
    bb = v_ref[pl.ds(2 * layer + 1, 1), :]

    z = jnp.dot(agg.astype(bf16), wa, preferred_element_type=f32) + ba
    z = jnp.maximum(z, 0.0)                                   # MLP ReLU (post-BN)
    z = jnp.dot(z.astype(bf16), wb, preferred_element_type=f32) + bb
    z = jnp.where(layer > 0, jnp.tanh(z), z)                  # conv2/conv3 Tanh
    z = jnp.where(layer < NUM_LAYERS - 1, jnp.maximum(z, 0.0), z)  # outer ReLU
    # (dropout = identity in eval mode)

    row0 = pl.multiple_of(tile * tn, tn)
    h_buf[dst, pl.ds(row0, tn), :] = z.astype(bf16)

    # -------- last grid step: global mean pool + MLP head ---------------------
    @pl.when((layer == pl.num_programs(0) - 1) & (tile == n_tiles - 1))
    def _():
        hf = h_buf[dst]                                       # final-layer output
        g = jnp.dot(p_ref[...], hf, preferred_element_type=f32)   # (G, 128)
        z1 = jnp.maximum(dotw(g, W_M1) + vec(V_M1), 0.0)
        gout_ref[...] = dotw(z1, W_M2) + vec(V_M2)


# ------------------------------------------------------------------------------
# Parameter packing (BN fold + zero-pad to lane-dense slabs, K|V fused)
# ------------------------------------------------------------------------------
def _pad_mat(w):
    fi, fo = w.shape
    return jnp.zeros((LANE, LANE), jnp.float32).at[:fi, :fo].set(w)


def _pad_vec(b):
    b = b.reshape(-1)
    return jnp.zeros((LANE,), jnp.float32).at[:b.shape[0]].set(b)


def pack_params(graph_params, text_params):
    (w1a, b1a, s1, t1, w1b, b1b,
     w2a, b2a, s2, t2, w2b, b2b,
     w3a, b3a, s3, t3, w3b, b3b,
     wm1, bm1, wm2, bm2) = graph_params

    def fold(wa, ba, s, t):      # eval-mode BatchNorm folded into Linear (exact)
        return wa * s, ba * s + t

    w1a, b1a = fold(w1a, b1a, s1, t1)
    w2a, b2a = fold(w2a, b2a, s2, t2)
    w3a, b3a = fold(w3a, b3a, s3, t3)

    (wq, bq, wk, bk, wv, bv, wo, bo,
     g1, be1, wf1, bf1, wf2, bf2, g2, be2) = text_params

    w_list = [w1a, w1b, w2a, w2b, w3a, w3b, wm1, wm2, wq, wo, wf1, wf2]
    v_list = [b1a, b1b, b2a, b2b, b3a, b3b, bm1, bm2,
              bq, bo, g1, be1, bf1, bf2, g2, be2]
    assert len(w_list) == NUM_W and len(v_list) == NUM_V

    w_slab = jnp.stack([_pad_mat(w) for w in w_list]).astype(jnp.bfloat16)
    v_slab = jnp.stack([_pad_vec(v) for v in v_list]).astype(jnp.float32)

    # fused K|V projection (256-lane RHS fills the 256-wide MXU on v6e/v7x)
    wkv = jnp.concatenate([_pad_mat(wk), _pad_mat(wv)], axis=1).astype(jnp.bfloat16)
    bkv = jnp.concatenate([_pad_vec(bk), _pad_vec(bv)]).reshape(1, 2 * LANE)
    return w_slab, v_slab, wkv, bkv.astype(jnp.float32)


# ------------------------------------------------------------------------------
# Wrapper: node-tiled grid, lane-dense padding, explicit VMEM budget + cost hint
# ------------------------------------------------------------------------------
def model_forward(a_hat, x_nodes, pool, x_emb, attention_mask,
                  w_slab, v_slab, wkv, bkv, *, nout, d_model, tn=16):
    N, F = x_nodes.shape
    G = pool.shape[0]
    B, L, D = x_emb.shape

    # pad node count to a tile multiple (zero rows/cols: padded nodes aggregate
    # nothing and have zero pooling weight, so they cannot leak into outputs)
    n_pad = max(pl.cdiv(N, tn) * tn, tn)
    lp = pl.cdiv(L, LANE) * LANE                      # lane-dense sequence length

    a_bf = jnp.zeros((n_pad, n_pad), jnp.bfloat16).at[:N, :N].set(
        a_hat.astype(jnp.bfloat16))
    x_pad = jnp.zeros((n_pad, LANE), jnp.bfloat16).at[:N, :F].set(
        x_nodes.astype(jnp.bfloat16))
    p_bf = jnp.zeros((G, n_pad), jnp.bfloat16).at[:, :N].set(
        pool.astype(jnp.bfloat16))
    xt_pad = jnp.zeros((B, lp, LANE), jnp.float32).at[:, :L, :D].set(
        x_emb.astype(jnp.float32))
    m_pad = jnp.zeros((B, lp), jnp.float32).at[:, :L].set(
        attention_mask.astype(jnp.float32))
    mask_bias = ((m_pad - 1.0) * 1e9).reshape(B, 1, lp)

    n_tiles = n_pad // tn
    grid = (NUM_LAYERS, n_tiles)

    def resident(shape):                               # DMA'd once, stays in VMEM
        zeros = (0,) * len(shape)
        return pl.BlockSpec(shape, lambda l, i: zeros)

    in_specs = [
        pl.BlockSpec((tn, n_pad), lambda l, i: (i, 0)),    # A: streamed per tile
        resident((n_pad, LANE)),                           # node features
        resident((G, n_pad)),                              # pooling matrix
        resident((B, lp, LANE)),                           # token embeddings
        resident((B, 1, lp)),                              # additive mask bias
        resident((NUM_W, LANE, LANE)),                     # weight slab
        resident((NUM_V, LANE)),                           # bias / LN slab
        resident((LANE, 2 * LANE)),                        # fused K|V weights
        resident((1, 2 * LANE)),                           # fused K|V bias
    ]
    out_specs = (resident((G, LANE)), resident((B, LANE)))

    # explicit VMEM budget: double-buffered A tile + resident arrays + scratch
    # h ping-pong + f32 temporaries, with 4x headroom (floor 16 MiB, cap 48 MiB)
    est = (2 * tn * n_pad * 2 + n_pad * LANE * 2 + G * n_pad * 2
           + B * lp * LANE * 4 + B * lp * 4
           + NUM_W * LANE * LANE * 2 + NUM_V * LANE * 4
           + LANE * 2 * LANE * 2 + 2 * LANE * 4
           + 2 * n_pad * LANE * 2 + (G + B) * LANE * 4
           + 8 * max(tn, B * lp) * LANE * 4)
    vmem_limit = int(min(max(4 * est, 16 * 1024 * 1024), 48 * 1024 * 1024))

    flops = int(
        NUM_LAYERS * 2 * n_pad * n_pad * LANE              # aggregations
        + NUM_LAYERS * 4 * n_pad * LANE * LANE             # GIN MLPs
        + 2 * G * n_pad * LANE + 4 * G * LANE * LANE       # pool + head
        + 2 * B * lp * LANE * 2 * LANE                     # fused K|V projection
        + 8 * B * LANE * LANE                              # Q, O, FF1, FF2 (CLS)
        + 4 * B * lp * LANE)                               # scores + context
    transcend = int(2 * n_pad * LANE + B * lp + B * LANE)
    bytes_acc = int(
        NUM_LAYERS * n_pad * n_pad * 2                     # A re-streamed per layer
        + n_pad * LANE * 2 + G * n_pad * 2
        + B * lp * LANE * 4 + B * lp * 4
        + NUM_W * LANE * LANE * 2 + NUM_V * LANE * 4
        + LANE * 2 * LANE * 2 + 2 * LANE * 4
        + (G + B) * LANE * 4)

    kern = functools.partial(_fused_kernel, d_model=d_model)

    gout, tout = pl.pallas_call(
        kern,
        out_shape=(jax.ShapeDtypeStruct((G, LANE), jnp.float32),
                   jax.ShapeDtypeStruct((B, LANE), jnp.float32)),
        grid=grid,
        in_specs=in_specs,
        out_specs=out_specs,
        scratch_shapes=[pltpu.VMEM((2, n_pad, LANE), jnp.bfloat16)],
        compiler_params=pltpu.CompilerParams(
            dimension_semantics=("arbitrary", "arbitrary"),
            vmem_limit_bytes=vmem_limit),
        cost_estimate=pl.CostEstimate(flops=flops, transcendentals=transcend,
                                      bytes_accessed=bytes_acc),
    )(a_bf, x_pad, p_bf, xt_pad, mask_bias, w_slab, v_slab, wkv, bkv)

    return gout[:, :nout], tout[:, :d_model]


# ------------------------------------------------------------------------------
# Parameter / input construction (deterministic, synthetic)
# ------------------------------------------------------------------------------
def _linear(key, fan_in, fan_out):
    kw, kb = jax.random.split(key)
    bound = 1.0 / math.sqrt(fan_in)
    w = jax.random.uniform(kw, (fan_in, fan_out), jnp.float32, -bound, bound)
    b = jax.random.uniform(kb, (1, fan_out), jnp.float32, -bound, bound)
    return w, b


def _bn_fold(key, n):
    # BatchNorm1d eval-mode expressed as y = x * s + t
    kg, kb = jax.random.split(key)
    gamma = 1.0 + 0.1 * jax.random.normal(kg, (1, n), jnp.float32)
    beta = 0.1 * jax.random.normal(kb, (1, n), jnp.float32)
    running_mean = jnp.zeros((1, n), jnp.float32)
    running_var = jnp.ones((1, n), jnp.float32)
    s = gamma / jnp.sqrt(running_var + 1e-5)
    t = beta - running_mean * s
    return s, t


def make_graph_params(key, num_node_features, nout, nhid, graph_hidden):
    keys = jax.random.split(key, 16)
    params = []
    dims = [(num_node_features, graph_hidden),
            (graph_hidden, graph_hidden),
            (graph_hidden, graph_hidden)]
    ki = 0
    for fi, fo in dims:
        wa, ba = _linear(keys[ki], fi, fo); ki += 1
        s, t = _bn_fold(keys[ki], fo); ki += 1
        wb, bb = _linear(keys[ki], fo, fo); ki += 1
        params += [wa, ba, s, t, wb, bb]
    wm1, bm1 = _linear(keys[ki], graph_hidden, nhid); ki += 1
    wm2, bm2 = _linear(keys[ki], nhid, nout); ki += 1
    params += [wm1, bm1, wm2, bm2]
    return params


def make_text_params(key, D, D_ff):
    keys = jax.random.split(key, 10)
    wq, bq = _linear(keys[0], D, D)
    wk, bk = _linear(keys[1], D, D)
    wv, bv = _linear(keys[2], D, D)
    wo, bo = _linear(keys[3], D, D)
    g1 = jnp.ones((1, 1, D), jnp.float32)
    be1 = jnp.zeros((1, 1, D), jnp.float32)
    wf1, bf1 = _linear(keys[4], D, D_ff)
    wf2, bf2 = _linear(keys[5], D_ff, D)
    g2 = jnp.ones((1, 1, D), jnp.float32)
    be2 = jnp.zeros((1, 1, D), jnp.float32)
    return [wq, bq, wk, bk, wv, bv, wo, bo,
            g1, be1, wf1, bf1, wf2, bf2, g2, be2]


if __name__ == "__main__":
    key = jax.random.PRNGKey(0)
    k_graph_p, k_text_p, k_x, k_edge, k_ids, k_emb, k_pos = jax.random.split(key, 7)

    # ---- shapes ----
    N, F, H, NHID, NOUT, G = 32, 8, 32, 32, 16, 2        # graph side
    B, L, D, D_FF, VOCAB = 2, 8, 32, 64, 64              # text side
    TN = 16                                              # node tile -> 2 tiles

    # ---- graph batch (x, edge_index, batch) ----
    x_nodes = jax.random.normal(k_x, (N, F), jnp.float32)
    E = 64
    k_src, k_dst = jax.random.split(k_edge)
    src = jax.random.randint(k_src, (E,), 0, N)
    dst = jax.random.randint(k_dst, (E,), 0, N)
    edge_index = jnp.stack([src, dst])                    # (2, E)
    batch = jnp.concatenate([jnp.zeros((N // 2,), jnp.int32),
                             jnp.ones((N - N // 2,), jnp.int32)])

    # dense A_hat = A + I  (GINConv with eps = 0; messages flow src -> dst)
    adj = jnp.zeros((N, N), jnp.float32).at[dst, src].add(1.0)
    a_hat = adj + jnp.eye(N, dtype=jnp.float32)
    # pooling matrix P[g, i] = 1/|graph g| if batch[i] == g
    onehot = (batch[None, :] == jnp.arange(G)[:, None]).astype(jnp.float32)
    pool = onehot / jnp.maximum(onehot.sum(axis=1, keepdims=True), 1.0)

    # ---- text batch (input_ids, attention_mask) ----
    input_ids = jax.random.randint(k_ids, (B, L), 0, VOCAB)
    attention_mask = jnp.array([[1] * L, [1] * 6 + [0] * 2], jnp.float32)
    emb_table = 0.1 * jax.random.normal(k_emb, (VOCAB, D), jnp.float32)
    pos_table = 0.1 * jax.random.normal(k_pos, (L, D), jnp.float32)
    x_emb = emb_table[input_ids] + pos_table[None, :, :]   # embedding lookup (glue)

    # ---- parameters (packed slabs + fused K|V) ----
    graph_params = make_graph_params(k_graph_p, F, NOUT, NHID, H)
    text_params = make_text_params(k_text_p, D, D_FF)
    w_slab, v_slab, wkv, bkv = pack_params(graph_params, text_params)

    # ---- run (single fused, node-tiled pallas_call) ----
    graph_encoded, text_encoded = model_forward(
        a_hat, x_nodes, pool, x_emb, attention_mask,
        w_slab, v_slab, wkv, bkv, nout=NOUT, d_model=D, tn=TN)
    jax.block_until_ready((graph_encoded, text_encoded))

    assert graph_encoded.shape == (G, NOUT)
    assert text_encoded.shape == (B, D)
    assert bool(jnp.all(jnp.isfinite(graph_encoded)))
    assert bool(jnp.all(jnp.isfinite(text_encoded)))
    print("KERNEL_OK")
</pallas_src>

<mosaic_0001>
module attributes {stable_mosaic.version = 11 : i64} {
  func.func @_fused_kernel(%arg0: i32, %arg1: i32, %arg2: memref<16x32xbf16, #tpu.memory_space<vmem>>, %arg3: memref<32x128xbf16, #tpu.memory_space<vmem>>, %arg4: memref<2x32xbf16, #tpu.memory_space<vmem>>, %arg5: memref<2x128x128xf32, #tpu.memory_space<vmem>>, %arg6: memref<2x1x128xf32, #tpu.memory_space<vmem>>, %arg7: memref<12x128x128xbf16, #tpu.memory_space<vmem>>, %arg8: memref<16x128xf32, #tpu.memory_space<vmem>>, %arg9: memref<128x256xbf16, #tpu.memory_space<vmem>>, %arg10: memref<1x256xf32, #tpu.memory_space<vmem>>, %arg11: memref<2x128xf32, #tpu.memory_space<vmem>>, %arg12: memref<2x128xf32, #tpu.memory_space<vmem>>, %arg13: memref<2x32x128xbf16, #tpu.memory_space<vmem>>) attributes {dimension_semantics = [#tpu.dimension_semantics<arbitrary>, #tpu.dimension_semantics<arbitrary>], iteration_bounds = array<i64: 3, 2>, scalar_prefetch = 0 : i64, scratch_operands = 1 : i64, tpu.core_type = #tpu.core_type<tc>, window_params = [{transform_indices = @transform_0, window_bounds = array<i64: 16, 32>}, {pipeline_mode = #tpu.pipeline_mode<synchronous>, transform_indices = @transform_1, window_bounds = array<i64: 32, 128>}, {pipeline_mode = #tpu.pipeline_mode<synchronous>, transform_indices = @transform_2, window_bounds = array<i64: 2, 32>}, {pipeline_mode = #tpu.pipeline_mode<synchronous>, transform_indices = @transform_3, window_bounds = array<i64: 2, 128, 128>}, {pipeline_mode = #tpu.pipeline_mode<synchronous>, transform_indices = @transform_4, window_bounds = array<i64: 2, 1, 128>}, {pipeline_mode = #tpu.pipeline_mode<synchronous>, transform_indices = @transform_5, window_bounds = array<i64: 12, 128, 128>}, {pipeline_mode = #tpu.pipeline_mode<synchronous>, transform_indices = @transform_6, window_bounds = array<i64: 16, 128>}, {pipeline_mode = #tpu.pipeline_mode<synchronous>, transform_indices = @transform_7, window_bounds = array<i64: 128, 256>}, {pipeline_mode = #tpu.pipeline_mode<synchronous>, transform_indices = @transform_8, window_bounds = array<i64: 1, 256>}, {pipeline_mode = #tpu.pipeline_mode<synchronous>, transform_indices = @transform_9, window_bounds = array<i64: 2, 128>}, {pipeline_mode = #tpu.pipeline_mode<synchronous>, transform_indices = @transform_10, window_bounds = array<i64: 2, 128>}]} {
    %c0_i32 = arith.constant 0 : i32
    %0 = arith.cmpi eq, %arg0, %c0_i32 : i32
    %c0_i32_0 = arith.constant 0 : i32
    %1 = arith.cmpi eq, %arg1, %c0_i32_0 : i32
    %2 = arith.andi %0, %1 : i1
    %3 = arith.extui %2 : i1 to i32
    %c0_i32_1 = arith.constant 0 : i32
    %4 = arith.cmpi ne, %3, %c0_i32_1 : i32
    scf.if %4 {
      %c0_32 = arith.constant 0 : index
      %c0_33 = arith.constant 0 : index
      %67 = vector.load %arg3[%c0_32, %c0_33] : memref<32x128xbf16, #tpu.memory_space<vmem>>, vector<32x128xbf16>
      %c0_34 = arith.constant 0 : index
      %c0_35 = arith.constant 0 : index
      %c0_36 = arith.constant 0 : index
      %68 = vector.load %arg13[%c0_34, %c0_35, %c0_36] : memref<2x32x128xbf16, #tpu.memory_space<vmem>>, vector<1x32x128xbf16>
      %69 = vector.shape_cast %68 : vector<1x32x128xbf16> to vector<32x128xbf16>
      %70 = vector.shape_cast %67 : vector<32x128xbf16> to vector<1x32x128xbf16>
      tpu.vector_store %arg13[%c0_34, %c0_35, %c0_36], %70 {strides = array<i32>} : memref<2x32x128xbf16, #tpu.memory_space<vmem>>, vector<1x32x128xbf16>,
      %c0_37 = arith.constant 0 : index
      %c0_38 = arith.constant 0 : index
      %c0_39 = arith.constant 0 : index
      %71 = vector.load %arg5[%c0_37, %c0_38, %c0_39] : memref<2x128x128xf32, #tpu.memory_space<vmem>>, vector<2x128x128xf32>
      %72 = vector.shape_cast %71 : vector<2x128x128xf32> to vector<256x128xf32>
      %73 = arith.truncf %72 : vector<256x128xf32> to vector<256x128xbf16>
      %c0_40 = arith.constant 0 : index
      %c0_41 = arith.constant 0 : index
      %74 = vector.load %arg9[%c0_40, %c0_41] : memref<128x256xbf16, #tpu.memory_space<vmem>>, vector<128x256xbf16>
      %cst_42 = arith.constant dense<0.000000e+00> : vector<256x256xf32>
      %75 = tpu.matmul %73, %74, %cst_42 {dimension_numbers = #tpu.dot_dimension_numbers<[1], [0], [0], [1], [0, 0, 1, 1], [], []>} : vector<256x128xbf16>, vector<128x256xbf16>, vector<256x256xf32> -> vector<256x256xf32>
      %c0_43 = arith.constant 0 : index
      %c0_44 = arith.constant 0 : index
      %76 = vector.load %arg10[%c0_43, %c0_44] : memref<1x256xf32, #tpu.memory_space<vmem>>, vector<1x256xf32>
      %77 = vector.broadcast %76 : vector<1x256xf32> to vector<256x256xf32>
      %78 = arith.addf %75, %77 : vector<256x256xf32>
      %79 = vector.extract_strided_slice %78 {offsets = [0, 0], sizes = [256, 128], strides = [1, 1]} : vector<256x256xf32> to vector<256x128xf32>
      %80 = vector.shape_cast %79 : vector<256x128xf32> to vector<2x128x128xf32>
      %81 = vector.extract_strided_slice %78 {offsets = [0, 128], sizes = [256, 128], strides = [1, 1]} : vector<256x256xf32> to vector<256x128xf32>
      %82 = vector.shape_cast %81 : vector<256x128xf32> to vector<2x128x128xf32>
      %83 = vector.extract_strided_slice %71 {offsets = [0, 0, 0], sizes = [2, 1, 128], strides = [1, 1, 1]} : vector<2x128x128xf32> to vector<2x1x128xf32>
      %84 = vector.shape_cast %83 : vector<2x1x128xf32> to vector<2x128xf32>
      %85 = arith.truncf %84 : vector<2x128xf32> to vector<2x128xbf16>
      %c8 = arith.constant 8 : index
      %c0_45 = arith.constant 0 : index
      %c0_46 = arith.constant 0 : index
      %86 = vector.load %arg7[%c8, %c0_45, %c0_46] : memref<12x128x128xbf16, #tpu.memory_space<vmem>>, vector<1x128x128xbf16>
      %87 = vector.shape_cast %86 : vector<1x128x128xbf16> to vector<128x128xbf16>
      %cst_47 = arith.constant dense<0.000000e+00> : vector<2x128xf32>
      %88 = tpu.matmul %85, %87, %cst_47 {dimension_numbers = #tpu.dot_dimension_numbers<[1], [0], [0], [1], [0, 0, 1, 1], [], []>} : vector<2x128xbf16>, vector<128x128xbf16>, vector<2x128xf32> -> vector<2x128xf32>
      %c8_48 = arith.constant 8 : index
      %c0_49 = arith.constant 0 : index
      %89 = vector.load %arg8[%c8_48, %c0_49] : memref<16x128xf32, #tpu.memory_space<vmem>>, vector<1x128xf32>
      %90 = vector.broadcast %89 : vector<1x128xf32> to vector<2x128xf32>
      %91 = arith.addf %88, %90 : vector<2x128xf32>
      %92 = vector.shape_cast %91 : vector<2x128xf32> to vector<2x1x128xf32>
      "tpu.trace_start"() <{level = 10 : i32, message = "bqd,bld->bql"}> : () -> ()
      %cst_50 = arith.constant dense<0.000000e+00> : vector<2x1x128xf32>
      %93 = tpu.matmul %92, %80, %cst_50 {dimension_numbers = #tpu.dot_dimension_numbers<[2], [2], [1], [1], [0, 0, 0, 1, 1, 1], [0], [0]>} : vector<2x1x128xf32>, vector<2x128x128xf32>, vector<2x1x128xf32> -> vector<2x1x128xf32>
      "tpu.trace_stop"() : () -> ()
      %cst_51 = arith.constant 0.176776692 : f32
      %94 = vector.broadcast %cst_51 : f32 to vector<2x1x128xf32>
      %95 = arith.mulf %93, %94 : vector<2x1x128xf32>
      %c0_52 = arith.constant 0 : index
      %c0_53 = arith.constant 0 : index
      %c0_54 = arith.constant 0 : index
      %96 = vector.load %arg6[%c0_52, %c0_53, %c0_54] : memref<2x1x128xf32, #tpu.memory_space<vmem>>, vector<2x1x128xf32>
      %97 = arith.addf %95, %96 : vector<2x1x128xf32>
      %cst_55 = arith.constant dense<0xFF800000> : vector<2x1xf32>
      %98 = vector.multi_reduction <maximumf>, %97, %cst_55 [2] : vector<2x1x128xf32> to vector<2x1xf32>
      %99 = vector.shape_cast %98 : vector<2x1xf32> to vector<2x1x1xf32>
      %100 = vector.broadcast %99 : vector<2x1x1xf32> to vector<2x1x128xf32>
      %101 = arith.subf %97, %100 : vector<2x1x128xf32>
      %102 = math.exp %101 : vector<2x1x128xf32>
      %cst_56 = arith.constant dense<0.000000e+00> : vector<2x1xf32>
      %103 = vector.multi_reduction <add>, %102, %cst_56 [2] : vector<2x1x128xf32> to vector<2x1xf32>
      %104 = vector.shape_cast %103 : vector<2x1xf32> to vector<2x1x1xf32>
      %105 = tpu.reciprocal %104 {approx = true} : vector<2x1x1xf32> -> vector<2x1x1xf32>
      %106 = vector.broadcast %105 : vector<2x1x1xf32> to vector<2x1x128xf32>
      %107 = arith.mulf %102, %106 : vector<2x1x128xf32>
      "tpu.trace_start"() <{level = 10 : i32, message = "bql,bld->bqd"}> : () -> ()
      %cst_57 = arith.constant dense<0.000000e+00> : vector<2x1x128xf32>
      %108 = tpu.matmul %107, %82, %cst_57 {dimension_numbers = #tpu.dot_dimension_numbers<[2], [1], [1], [2], [0, 0, 0, 1, 1, 2], [0], [0]>} : vector<2x1x128xf32>, vector<2x128x128xf32>, vector<2x1x128xf32> -> vector<2x1x128xf32>
      "tpu.trace_stop"() : () -> ()
      %109 = vector.shape_cast %108 : vector<2x1x128xf32> to vector<2x128xf32>
      %110 = arith.truncf %109 : vector<2x128xf32> to vector<2x128xbf16>
      %c9 = arith.constant 9 : index
      %c0_58 = arith.constant 0 : index
      %c0_59 = arith.constant 0 : index
      %111 = vector.load %arg7[%c9, %c0_58, %c0_59] : memref<12x128x128xbf16, #tpu.memory_space<vmem>>, vector<1x128x128xbf16>
      %112 = vector.shape_cast %111 : vector<1x128x128xbf16> to vector<128x128xbf16>
      %cst_60 = arith.constant dense<0.000000e+00> : vector<2x128xf32>
      %113 = tpu.matmul %110, %112, %cst_60 {dimension_numbers = #tpu.dot_dimension_numbers<[1], [0], [0], [1], [0, 0, 1, 1], [], []>} : vector<2x128xbf16>, vector<128x128xbf16>, vector<2x128xf32> -> vector<2x128xf32>
      %c9_61 = arith.constant 9 : index
      %c0_62 = arith.constant 0 : index
      %114 = vector.load %arg8[%c9_61, %c0_62] : memref<16x128xf32, #tpu.memory_space<vmem>>, vector<1x128xf32>
      %115 = vector.broadcast %114 : vector<1x128xf32> to vector<2x128xf32>
      %116 = arith.addf %113, %115 : vector<2x128xf32>
      %117 = arith.addf %84, %116 : vector<2x128xf32>
      %cst_63 = arith.constant dense<0.000000e+00> : vector<2xf32>
      %118 = vector.multi_reduction <add>, %117, %cst_63 [1] : vector<2x128xf32> to vector<2xf32>
      %119 = vector.shape_cast %118 : vector<2xf32> to vector<2x1xf32>
      %cst_64 = arith.constant 3.125000e-02 : f32
      %120 = vector.broadcast %cst_64 : f32 to vector<2x1xf32>
      %121 = arith.mulf %119, %120 : vector<2x1xf32>
      %122 = arith.mulf %117, %117 : vector<2x128xf32>
      %cst_65 = arith.constant dense<0.000000e+00> : vector<2xf32>
      %123 = vector.multi_reduction <add>, %122, %cst_65 [1] : vector<2x128xf32> to vector<2xf32>
      %124 = vector.shape_cast %123 : vector<2xf32> to vector<2x1xf32>
      %cst_66 = arith.constant 3.125000e-02 : f32
      %125 = vector.broadcast %cst_66 : f32 to vector<2x1xf32>
      %126 = arith.mulf %124, %125 : vector<2x1xf32>
      %127 = arith.mulf %121, %121 : vector<2x1xf32>
      %128 = arith.subf %126, %127 : vector<2x1xf32>
      %129 = vector.broadcast %121 : vector<2x1xf32> to vector<2x128xf32>
      %130 = arith.subf %117, %129 : vector<2x128xf32>
      %cst_67 = arith.constant 9.99999974E-6 : f32
      %131 = vector.broadcast %cst_67 : f32 to vector<2x1xf32>
      %132 = arith.addf %128, %131 : vector<2x1xf32>
      %133 = math.rsqrt %132 : vector<2x1xf32>
      %134 = vector.broadcast %133 : vector<2x1xf32> to vector<2x128xf32>
      %135 = arith.mulf %130, %134 : vector<2x128xf32>
      %c10 = arith.constant 10 : index
      %c0_68 = arith.constant 0 : index
      %136 = vector.load %arg8[%c10, %c0_68] : memref<16x128xf32, #tpu.memory_space<vmem>>, vector<1x128xf32>
      %137 = vector.broadcast %136 : vector<1x128xf32> to vector<2x128xf32>
      %138 = arith.mulf %135, %137 : vector<2x128xf32>
      %c11 = arith.constant 11 : index
      %c0_69 = arith.constant 0 : index
      %139 = vector.load %arg8[%c11, %c0_69] : memref<16x128xf32, #tpu.memory_space<vmem>>, vector<1x128xf32>
      %140 = vector.broadcast %139 : vector<1x128xf32> to vector<2x128xf32>
      %141 = arith.addf %138, %140 : vector<2x128xf32>
      %142 = arith.truncf %141 : vector<2x128xf32> to vector<2x128xbf16>
      %c10_70 = arith.constant 10 : index
      %c0_71 = arith.constant 0 : index
      %c0_72 = arith.constant 0 : index
      %143 = vector.load %arg7[%c10_70, %c0_71, %c0_72] : memref<12x128x128xbf16, #tpu.memory_space<vmem>>, vector<1x128x128xbf16>
      %144 = vector.shape_cast %143 : vector<1x128x128xbf16> to vector<128x128xbf16>
      %cst_73 = arith.constant dense<0.000000e+00> : vector<2x128xf32>
      %145 = tpu.matmul %142, %144, %cst_73 {dimension_numbers = #tpu.dot_dimension_numbers<[1], [0], [0], [1], [0, 0, 1, 1], [], []>} : vector<2x128xbf16>, vector<128x128xbf16>, vector<2x128xf32> -> vector<2x128xf32>
      %c12 = arith.constant 12 : index
      %c0_74 = arith.constant 0 : index
      %146 = vector.load %arg8[%c12, %c0_74] : memref<16x128xf32, #tpu.memory_space<vmem>>, vector<1x128xf32>
      %147 = vector.broadcast %146 : vector<1x128xf32> to vector<2x128xf32>
      %148 = arith.addf %145, %147 : vector<2x128xf32>
      %cst_75 = arith.constant 5.000000e-01 : f32
      %149 = vector.broadcast %cst_75 : f32 to vector<2x128xf32>
      %150 = arith.mulf %149, %148 : vector<2x128xf32>
      %cst_76 = arith.constant 4.471500e-02 : f32
      %151 = vector.broadcast %cst_76 : f32 to vector<2x128xf32>
      %152 = arith.mulf %151, %148 : vector<2x128xf32>
      %153 = arith.mulf %152, %148 : vector<2x128xf32>
      %154 = arith.mulf %153, %148 : vector<2x128xf32>
      %155 = arith.addf %148, %154 : vector<2x128xf32>
      %cst_77 = arith.constant 0.797884583 : f32
      %156 = vector.broadcast %cst_77 : f32 to vector<2x128xf32>
      %157 = arith.mulf %156, %155 : vector<2x128xf32>
      %158 = math.tanh %157 : vector<2x128xf32>
      %cst_78 = arith.constant 1.000000e+00 : f32
      %159 = vector.broadcast %cst_78 : f32 to vector<2x128xf32>
      %160 = arith.addf %159, %158 : vector<2x128xf32>
      %161 = arith.mulf %150, %160 : vector<2x128xf32>
      %162 = arith.truncf %161 : vector<2x128xf32> to vector<2x128xbf16>
      %c11_79 = arith.constant 11 : index
      %c0_80 = arith.constant 0 : index
      %c0_81 = arith.constant 0 : index
      %163 = vector.load %arg7[%c11_79, %c0_80, %c0_81] : memref<12x128x128xbf16, #tpu.memory_space<vmem>>, vector<1x128x128xbf16>
      %164 = vector.shape_cast %163 : vector<1x128x128xbf16> to vector<128x128xbf16>
      %cst_82 = arith.constant dense<0.000000e+00> : vector<2x128xf32>
      %165 = tpu.matmul %162, %164, %cst_82 {dimension_numbers = #tpu.dot_dimension_numbers<[1], [0], [0], [1], [0, 0, 1, 1], [], []>} : vector<2x128xbf16>, vector<128x128xbf16>, vector<2x128xf32> -> vector<2x128xf32>
      %c13 = arith.constant 13 : index
      %c0_83 = arith.constant 0 : index
      %166 = vector.load %arg8[%c13, %c0_83] : memref<16x128xf32, #tpu.memory_space<vmem>>, vector<1x128xf32>
      %167 = vector.broadcast %166 : vector<1x128xf32> to vector<2x128xf32>
      %168 = arith.addf %165, %167 : vector<2x128xf32>
      %169 = arith.addf %141, %168 : vector<2x128xf32>
      %cst_84 = arith.constant dense<0.000000e+00> : vector<2xf32>
      %170 = vector.multi_reduction <add>, %169, %cst_84 [1] : vector<2x128xf32> to vector<2xf32>
      %171 = vector.shape_cast %170 : vector<2xf32> to vector<2x1xf32>
      %cst_85 = arith.constant 3.125000e-02 : f32
      %172 = vector.broadcast %cst_85 : f32 to vector<2x1xf32>
      %173 = arith.mulf %171, %172 : vector<2x1xf32>
      %174 = arith.mulf %169, %169 : vector<2x128xf32>
      %cst_86 = arith.constant dense<0.000000e+00> : vector<2xf32>
      %175 = vector.multi_reduction <add>, %174, %cst_86 [1] : vector<2x128xf32> to vector<2xf32>
      %176 = vector.shape_cast %175 : vector<2xf32> to vector<2x1xf32>
      %cst_87 = arith.constant 3.125000e-02 : f32
      %177 = vector.broadcast %cst_87 : f32 to vector<2x1xf32>
      %178 = arith.mulf %176, %177 : vector<2x1xf32>
      %179 = arith.mulf %173, %173 : vector<2x1xf32>
      %180 = arith.subf %178, %179 : vector<2x1xf32>
      %181 = vector.broadcast %173 : vector<2x1xf32> to vector<2x128xf32>
      %182 = arith.subf %169, %181 : vector<2x128xf32>
      %cst_88 = arith.constant 9.99999974E-6 : f32
      %183 = vector.broadcast %cst_88 : f32 to vector<2x1xf32>
      %184 = arith.addf %180, %183 : vector<2x1xf32>
      %185 = math.rsqrt %184 : vector<2x1xf32>
      %186 = vector.broadcast %185 : vector<2x1xf32> to vector<2x128xf32>
      %187 = arith.mulf %182, %186 : vector<2x128xf32>
      %c14 = arith.constant 14 : index
      %c0_89 = arith.constant 0 : index
      %188 = vector.load %arg8[%c14, %c0_89] : memref<16x128xf32, #tpu.memory_space<vmem>>, vector<1x128xf32>
      %189 = vector.broadcast %188 : vector<1x128xf32> to vector<2x128xf32>
      %190 = arith.mulf %187, %189 : vector<2x128xf32>
      %c15 = arith.constant 15 : index
      %c0_90 = arith.constant 0 : index
      %191 = vector.load %arg8[%c15, %c0_90] : memref<16x128xf32, #tpu.memory_space<vmem>>, vector<1x128xf32>
      %192 = vector.broadcast %191 : vector<1x128xf32> to vector<2x128xf32>
      %193 = arith.addf %190, %192 : vector<2x128xf32>
      %c0_91 = arith.constant 0 : index
      %c0_92 = arith.constant 0 : index
      %194 = vector.load %arg12[%c0_91, %c0_92] : memref<2x128xf32, #tpu.memory_space<vmem>>, vector<2x128xf32>
      tpu.vector_store %arg12[%c0_91, %c0_92], %193 {strides = array<i32>} : memref<2x128xf32, #tpu.memory_space<vmem>>, vector<2x128xf32>,
    } else {
    }
    %c2_i32 = arith.constant 2 : i32
    %c0_i32_2 = arith.constant 0 : i32
    %5 = arith.cmpi eq, %c2_i32, %c0_i32_2 : i32
    %c1_i32 = arith.constant 1 : i32
    %6 = arith.select %5, %c1_i32, %c2_i32 : i32
    %7 = arith.remsi %arg0, %6 : i32
    %c0_i32_3 = arith.constant 0 : i32
    %8 = arith.cmpi ne, %7, %c0_i32_3 : i32
    %c0_i32_4 = arith.constant 0 : i32
    %9 = arith.cmpi slt, %7, %c0_i32_4 : i32
    %c0_i32_5 = arith.constant 0 : i32
    %10 = arith.cmpi slt, %6, %c0_i32_5 : i32
    %11 = arith.xori %9, %10 : i1
    %12 = arith.andi %11, %8 : i1
    %13 = arith.addi %7, %6 : i32
    %14 = arith.select %12, %13, %7 : i32
    %c1_i32_6 = arith.constant 1 : i32
    %15 = arith.subi %c1_i32_6, %14 : i32
    %c0 = arith.constant 0 : index
    %c0_7 = arith.constant 0 : index
    %16 = vector.load %arg2[%c0, %c0_7] : memref<16x32xbf16, #tpu.memory_space<vmem>>, vector<16x32xbf16>
    %17 = arith.index_cast %14 : i32 to index
    %c0_8 = arith.constant 0 : index
    %c0_9 = arith.constant 0 : index
    %18 = vector.load %arg13[%17, %c0_8, %c0_9] : memref<2x32x128xbf16, #tpu.memory_space<vmem>>, vector<1x32x128xbf16>
    %19 = vector.shape_cast %18 : vector<1x32x128xbf16> to vector<32x128xbf16>
    %cst = arith.constant dense<0.000000e+00> : vector<16x128xf32>
    %20 = tpu.matmul %16, %19, %cst {dimension_numbers = #tpu.dot_dimension_numbers<[1], [0], [0], [1], [0, 0, 1, 1], [], []>} : vector<16x32xbf16>, vector<32x128xbf16>, vector<16x128xf32> -> vector<16x128xf32>
    %c2_i32_10 = arith.constant 2 : i32
    %21 = arith.muli %c2_i32_10, %arg0 : i32
    %22 = arith.index_cast %21 : i32 to index
    %c0_11 = arith.constant 0 : index
    %c0_12 = arith.constant 0 : index
    %23 = vector.load %arg7[%22, %c0_11, %c0_12] : memref<12x128x128xbf16, #tpu.memory_space<vmem>>, vector<1x128x128xbf16>
    %24 = vector.shape_cast %23 : vector<1x128x128xbf16> to vector<128x128xbf16>
    %c2_i32_13 = arith.constant 2 : i32
    %25 = arith.muli %c2_i32_13, %arg0 : i32
    %c1_i32_14 = arith.constant 1 : i32
    %26 = arith.addi %25, %c1_i32_14 : i32
    %27 = arith.index_cast %26 : i32 to index
    %c0_15 = arith.constant 0 : index
    %c0_16 = arith.constant 0 : index
    %28 = vector.load %arg7[%27, %c0_15, %c0_16] : memref<12x128x128xbf16, #tpu.memory_space<vmem>>, vector<1x128x128xbf16>
    %29 = vector.shape_cast %28 : vector<1x128x128xbf16> to vector<128x128xbf16>
    %c2_i32_17 = arith.constant 2 : i32
    %30 = arith.muli %c2_i32_17, %arg0 : i32
    %31 = arith.index_cast %30 : i32 to index
    %c0_18 = arith.constant 0 : index
    %32 = vector.load %arg8[%31, %c0_18] : memref<16x128xf32, #tpu.memory_space<vmem>>, vector<1x128xf32>
    %c2_i32_19 = arith.constant 2 : i32
    %33 = arith.muli %c2_i32_19, %arg0 : i32
    %c1_i32_20 = arith.constant 1 : i32
    %34 = arith.addi %33, %c1_i32_20 : i32
    %35 = arith.index_cast %34 : i32 to index
    %c0_21 = arith.constant 0 : index
    %36 = vector.load %arg8[%35, %c0_21] : memref<16x128xf32, #tpu.memory_space<vmem>>, vector<1x128xf32>
    %37 = arith.truncf %20 : vector<16x128xf32> to vector<16x128xbf16>
    %cst_22 = arith.constant dense<0.000000e+00> : vector<16x128xf32>
    %38 = tpu.matmul %37, %24, %cst_22 {dimension_numbers = #tpu.dot_dimension_numbers<[1], [0], [0], [1], [0, 0, 1, 1], [], []>} : vector<16x128xbf16>, vector<128x128xbf16>, vector<16x128xf32> -> vector<16x128xf32>
    %39 = vector.broadcast %32 : vector<1x128xf32> to vector<16x128xf32>
    %40 = arith.addf %38, %39 : vector<16x128xf32>
    %cst_23 = arith.constant 0.000000e+00 : f32
    %41 = vector.broadcast %cst_23 : f32 to vector<16x128xf32>
    %42 = arith.maximumf %40, %41 : vector<16x128xf32>
    %43 = arith.truncf %42 : vector<16x128xf32> to vector<16x128xbf16>
    %cst_24 = arith.constant dense<0.000000e+00> : vector<16x128xf32>
    %44 = tpu.matmul %43, %29, %cst_24 {dimension_numbers = #tpu.dot_dimension_numbers<[1], [0], [0], [1], [0, 0, 1, 1], [], []>} : vector<16x128xbf16>, vector<128x128xbf16>, vector<16x128xf32> -> vector<16x128xf32>
    %45 = vector.broadcast %36 : vector<1x128xf32> to vector<16x128xf32>
    %46 = arith.addf %44, %45 : vector<16x128xf32>
    %c0_i32_25 = arith.constant 0 : i32
    %47 = arith.cmpi sgt, %arg0, %c0_i32_25 : i32
    %48 = math.tanh %46 : vector<16x128xf32>
    %49 = arith.select %47, %48, %46 : vector<16x128xf32>
    %c2_i32_26 = arith.constant 2 : i32
    %50 = arith.cmpi slt, %arg0, %c2_i32_26 : i32
    %cst_27 = arith.constant 0.000000e+00 : f32
    %51 = vector.broadcast %cst_27 : f32 to vector<16x128xf32>
    %52 = arith.maximumf %49, %51 : vector<16x128xf32>
    %53 = arith.select %50, %52, %49 : vector<16x128xf32>
    %c16_i32 = arith.constant 16 : i32
    %54 = arith.muli %arg1, %c16_i32 : i32
    %55 = tpu.assume_multiple %54, 16 : i32
    %56 = arith.truncf %53 : vector<16x128xf32> to vector<16x128xbf16>
    %57 = arith.index_cast %15 : i32 to index
    %58 = arith.index_cast %55 : i32 to index
    %c0_28 = arith.constant 0 : index
    %59 = vector.load %arg13[%57, %58, %c0_28] : memref<2x32x128xbf16, #tpu.memory_space<vmem>>, vector<1x16x128xbf16>
    %60 = vector.shape_cast %59 : vector<1x16x128xbf16> to vector<16x128xbf16>
    %61 = vector.shape_cast %56 : vector<16x128xbf16> to vector<1x16x128xbf16>
    tpu.vector_store %arg13[%57, %58, %c0_28], %61 {strides = array<i32>} : memref<2x32x128xbf16, #tpu.memory_space<vmem>>, vector<1x16x128xbf16>,
    %c2_i32_29 = arith.constant 2 : i32
    %62 = arith.cmpi eq, %arg0, %c2_i32_29 : i32
    %c1_i32_30 = arith.constant 1 : i32
    %63 = arith.cmpi eq, %arg1, %c1_i32_30 : i32
    %64 = arith.andi %62, %63 : i1
    %65 = arith.extui %64 : i1 to i32
    %c0_i32_31 = arith.constant 0 : i32
    %66 = arith.cmpi ne, %65, %c0_i32_31 : i32
    scf.if %66 {
      %67 = arith.index_cast %15 : i32 to index
      %c0_32 = arith.constant 0 : index
      %c0_33 = arith.constant 0 : index
      %68 = vector.load %arg13[%67, %c0_32, %c0_33] : memref<2x32x128xbf16, #tpu.memory_space<vmem>>, vector<1x32x128xbf16>
      %69 = vector.shape_cast %68 : vector<1x32x128xbf16> to vector<32x128xbf16>
      %c0_34 = arith.constant 0 : index
      %c0_35 = arith.constant 0 : index
      %70 = vector.load %arg4[%c0_34, %c0_35] : memref<2x32xbf16, #tpu.memory_space<vmem>>, vector<2x32xbf16>
      %cst_36 = arith.constant dense<0.000000e+00> : vector<2x128xf32>
      %71 = tpu.matmul %70, %69, %cst_36 {dimension_numbers = #tpu.dot_dimension_numbers<[1], [0], [0], [1], [0, 0, 1, 1], [], []>} : vector<2x32xbf16>, vector<32x128xbf16>, vector<2x128xf32> -> vector<2x128xf32>
      %72 = arith.truncf %71 : vector<2x128xf32> to vector<2x128xbf16>
      %c6 = arith.constant 6 : index
      %c0_37 = arith.constant 0 : index
      %c0_38 = arith.constant 0 : index
      %73 = vector.load %arg7[%c6, %c0_37, %c0_38] : memref<12x128x128xbf16, #tpu.memory_space<vmem>>, vector<1x128x128xbf16>
      %74 = vector.shape_cast %73 : vector<1x128x128xbf16> to vector<128x128xbf16>
      %cst_39 = arith.constant dense<0.000000e+00> : vector<2x128xf32>
      %75 = tpu.matmul %72, %74, %cst_39 {dimension_numbers = #tpu.dot_dimension_numbers<[1], [0], [0], [1], [0, 0, 1, 1], [], []>} : vector<2x128xbf16>, vector<128x128xbf16>, vector<2x128xf32> -> vector<2x128xf32>
      %c6_40 = arith.constant 6 : index
      %c0_41 = arith.constant 0 : index
      %76 = vector.load %arg8[%c6_40, %c0_41] : memref<16x128xf32, #tpu.memory_space<vmem>>, vector<1x128xf32>
      %77 = vector.broadcast %76 : vector<1x128xf32> to vector<2x128xf32>
      %78 = arith.addf %75, %77 : vector<2x128xf32>
      %cst_42 = arith.constant 0.000000e+00 : f32
      %79 = vector.broadcast %cst_42 : f32 to vector<2x128xf32>
      %80 = arith.maximumf %78, %79 : vector<2x128xf32>
      %81 = arith.truncf %80 : vector<2x128xf32> to vector<2x128xbf16>
      %c7 = arith.constant 7 : index
      %c0_43 = arith.constant 0 : index
      %c0_44 = arith.constant 0 : index
      %82 = vector.load %arg7[%c7, %c0_43, %c0_44] : memref<12x128x128xbf16, #tpu.memory_space<vmem>>, vector<1x128x128xbf16>
      %83 = vector.shape_cast %82 : vector<1x128x128xbf16> to vector<128x128xbf16>
      %cst_45 = arith.constant dense<0.000000e+00> : vector<2x128xf32>
      %84 = tpu.matmul %81, %83, %cst_45 {dimension_numbers = #tpu.dot_dimension_numbers<[1], [0], [0], [1], [0, 0, 1, 1], [], []>} : vector<2x128xbf16>, vector<128x128xbf16>, vector<2x128xf32> -> vector<2x128xf32>
      %c7_46 = arith.constant 7 : index
      %c0_47 = arith.constant 0 : index
      %85 = vector.load %arg8[%c7_46, %c0_47] : memref<16x128xf32, #tpu.memory_space<vmem>>, vector<1x128xf32>
      %86 = vector.broadcast %85 : vector<1x128xf32> to vector<2x128xf32>
      %87 = arith.addf %84, %86 : vector<2x128xf32>
      %c0_48 = arith.constant 0 : index
      %c0_49 = arith.constant 0 : index
      %88 = vector.load %arg11[%c0_48, %c0_49] : memref<2x128xf32, #tpu.memory_space<vmem>>, vector<2x128xf32>
      tpu.vector_store %arg11[%c0_48, %c0_49], %87 {strides = array<i32>} : memref<2x128xf32, #tpu.memory_space<vmem>>, vector<2x128xf32>,
    } else {
    }
    return
  }
  func.func @transform_0(%arg0: i32, %arg1: i32) -> (i32, i32) {
    %c0_i32 = arith.constant 0 : i32
    %c0_i32_0 = arith.constant 0 : i32
    return %arg1, %c0_i32 : i32, i32
  }
  func.func @transform_1(%arg0: i32, %arg1: i32) -> (i32, i32) {
    %c0_i32 = arith.constant 0 : i32
    %c0_i32_0 = arith.constant 0 : i32
    %c0_i32_1 = arith.constant 0 : i32
    return %c0_i32, %c0_i32_0 : i32, i32
  }
  func.func @transform_2(%arg0: i32, %arg1: i32) -> (i32, i32) {
    %c0_i32 = arith.constant 0 : i32
    %c0_i32_0 = arith.constant 0 : i32
    %c0_i32_1 = arith.constant 0 : i32
    return %c0_i32, %c0_i32_0 : i32, i32
  }
  func.func @transform_3(%arg0: i32, %arg1: i32) -> (i32, i32, i32) {
    %c0_i32 = arith.constant 0 : i32
    %c0_i32_0 = arith.constant 0 : i32
    %c0_i32_1 = arith.constant 0 : i32
    %c0_i32_2 = arith.constant 0 : i32
    return %c0_i32, %c0_i32_0, %c0_i32_1 : i32, i32, i32
  }
  func.func @transform_4(%arg0: i32, %arg1: i32) -> (i32, i32, i32) {
    %c0_i32 = arith.constant 0 : i32
    %c0_i32_0 = arith.constant 0 : i32
    %c0_i32_1 = arith.constant 0 : i32
    %c0_i32_2 = arith.constant 0 : i32
    return %c0_i32, %c0_i32_0, %c0_i32_1 : i32, i32, i32
  }
  func.func @transform_5(%arg0: i32, %arg1: i32) -> (i32, i32, i32) {
    %c0_i32 = arith.constant 0 : i32
    %c0_i32_0 = arith.constant 0 : i32
    %c0_i32_1 = arith.constant 0 : i32
    %c0_i32_2 = arith.constant 0 : i32
    return %c0_i32, %c0_i32_0, %c0_i32_1 : i32, i32, i32
  }
  func.func @transform_6(%arg0: i32, %arg1: i32) -> (i32, i32) {
    %c0_i32 = arith.constant 0 : i32
    %c0_i32_0 = arith.constant 0 : i32
    %c0_i32_1 = arith.constant 0 : i32
    return %c0_i32, %c0_i32_0 : i32, i32
  }
  func.func @transform_7(%arg0: i32, %arg1: i32) -> (i32, i32) {
    %c0_i32 = arith.constant 0 : i32
    %c0_i32_0 = arith.constant 0 : i32
    %c0_i32_1 = arith.constant 0 : i32
    return %c0_i32, %c0_i32_0 : i32, i32
  }
  func.func @transform_8(%arg0: i32, %arg1: i32) -> (i32, i32) {
    %c0_i32 = arith.constant 0 : i32
    %c0_i32_0 = arith.constant 0 : i32
    %c0_i32_1 = arith.constant 0 : i32
    return %c0_i32, %c0_i32_0 : i32, i32
  }
  func.func @transform_9(%arg0: i32, %arg1: i32) -> (i32, i32) {
    %c0_i32 = arith.constant 0 : i32
    %c0_i32_0 = arith.constant 0 : i32
    %c0_i32_1 = arith.constant 0 : i32
    return %c0_i32, %c0_i32_0 : i32, i32
  }
  func.func @transform_10(%arg0: i32, %arg1: i32) -> (i32, i32) {
    %c0_i32 = arith.constant 0 : i32
    %c0_i32_0 = arith.constant 0 : i32
    %c0_i32_1 = arith.constant 0 : i32
    return %c0_i32, %c0_i32_0 : i32, i32
  }
}

</mosaic_0001>

<llo_original>
// kernel: tpu_custom_call.1
$region0: #{tpu_custom_call.1}
  #allocation0 [shape = 'u32[]', space=smem, size = 0x4, offset = 0x4, fixed_abs, tag = 'smem constant byte address 0x4 - core index']
  #allocation1 [shape = 'u32[144,128]{1,0:T(1,128)}', space=vmem, size = 0x12000, scoped, tag = 'internal scratch']
  #allocation2 [shape = 'bf16[2,32,128]{2,1,0:T(16,128)(2,1)}', space=vmem, size = 0x4000, scoped, tag = 'scratch operand']
  %s0 = inlined_call_operand.hbm [shape: bf16[32,32], index: 0, kind: input, shape index: {}]
  %s1 = inlined_call_operand.hbm [shape: bf16[32,128], index: 1, kind: input, shape index: {}]
  %s2 = inlined_call_operand.vmem [shape: bf16[2,32], index: 2, kind: input, shape index: {}]
  %s3 = inlined_call_operand.hbm [shape: f32[2,128,128], index: 3, kind: input, shape index: {}]
  %s4 = inlined_call_operand.vmem [shape: f32[2,1,128], index: 4, kind: input, shape index: {}]
  %s5 = inlined_call_operand.hbm [shape: bf16[12,128,128], index: 5, kind: input, shape index: {}]
  %s6 = inlined_call_operand.vmem [shape: f32[16,128], index: 6, kind: input, shape index: {}]
  %s7 = inlined_call_operand.hbm [shape: bf16[128,256], index: 7, kind: input, shape index: {}]
  %s8 = inlined_call_operand.vmem [shape: f32[1,256], index: 8, kind: input, shape index: {}]
  %s9 = inlined_call_operand.hbm [shape: f32[2,128], index: 9, kind: output, shape index: {0}]
  %s10 = inlined_call_operand.hbm [shape: f32[2,128], index: 10, kind: output, shape index: {1}]
  %11 = xla_tuple %s9, %s10
  %s12 = sld [smem:[#allocation0]]
  $region105: #{tpu_custom_call.1} parent=0
    _
  %s14 = ssub.s32 1, %s12
  %s15 = scalar_select 0, %s14, %s12
  $region1: #{tpu_custom_call.1} parent=0
    #allocation3 [shape = 'u8[8192]{0}', space=vmem, size = 0x2000, scoped, tag = 'input window, operand 0']
    #allocation4 [shape = 's32[2]{0}', space=sflag, size = 0x8, scoped, tag = 'scoped memory for tpu_custom_call.1']
    #allocation5 [shape = 's32[2]{0}', space=sflag, size = 0x8, scoped, tag = 'scoped memory for tpu_custom_call.1']
    #allocation6 [shape = 'u8[8192]{0}', space=vmem, size = 0x2000, scoped, tag = 'input window, operand 1, single buffered']
    #allocation7 [shape = 's32[1]{0}', space=sflag, size = 0x4, scoped, tag = 'scoped memory for tpu_custom_call.1']
    #allocation8 [shape = 'u8[131072]{0}', space=vmem, size = 0x20000, scoped, tag = 'input window, operand 3, single buffered']
    #allocation9 [shape = 'u8[393216]{0}', space=vmem, size = 0x60000, scoped, tag = 'input window, operand 5, single buffered']
    #allocation10 [shape = 's32[1]{0}', space=sflag, size = 0x4, scoped, tag = 'scoped memory for tpu_custom_call.1']
    #allocation11 [shape = 'u8[65536]{0}', space=vmem, size = 0x10000, scoped, tag = 'input window, operand 7, single buffered']
    #allocation12 [shape = 'u8[1024]{0}', space=vmem, size = 0x400, scoped, tag = 'output window, operand 0, single buffered']
    #allocation13 [shape = 'u8[1024]{0}', space=vmem, size = 0x400, scoped, tag = 'output window, operand 1, single buffered']
    #allocation14 [shape = 's32[1]{0}', space=sflag, size = 0x4, scoped, tag = 'scoped memory for tpu_custom_call.1']
    %16 = vsyncpa [#allocation4], 0
    %s17 = scalar_lea.sflag [#allocation4], 1
    %18 = vsyncpa %s17, 0
    %19 = vsyncpa [#allocation7], 0
    %20 = vsyncpa [#allocation10], 0
    %21 = vsyncpa [#allocation5], 0
    %22 = vsyncpa [#allocation14], 0
    loop: start=0, step=1, limit=8
    $region2: #{tpu_custom_call.1} parent=1 // loop_pre_header
      _
    $region3: #{tpu_custom_call.1} parent=1 // loop_header
      %s24 = sphi 0, %s28
      %p25 = scmp.ge.s32.totalorder %s24, 8
      %s31 = sphi 0, %s43
      %s32 = sphi 0, %s39
      %s33 = sphi 0, %s31
      %s34 = sphi 0, %s32
      %s35 = sphi 0, %s33
      %s36 = sphi 0, %s34
      %s46 = sphi 0, %s48
      %s49 = sphi 0, %s46
      %s50 = sphi 0, %s49
      %s66 = sphi 0, %s50
      %s70 = sphi 0, %s70
      %s72 = sphi 0, %s70
      %s73 = sphi 0, %s72
      %s87 = sphi 0, %s73
      %s91 = sphi 0, %s91
      %s93 = sphi 0, %s91
      %s94 = sphi 0, %s93
      %s108 = sphi 0, %s94
      %s112 = sphi 0, %s112
      %s114 = sphi 0, %s112
      %s115 = sphi 0, %s114
      %s129 = sphi 0, %s115
      %s133 = sphi 0, %s133
      %s135 = sphi 0, %s133
      %s136 = sphi 0, %s135
      %s150 = sphi 0, %s136
      %s154 = sphi 0, %s154
      %s156 = sphi 0, %s154
      %s157 = sphi 0, %s156
      %s171 = sphi 0, %s157
      %s175 = sphi 0, %s175
      %s177 = sphi 0, %s175
      %s178 = sphi 0, %s177
      %s192 = sphi 0, %s178
      %s196 = sphi 0, %s196
      %s198 = sphi 0, %s196
      %s199 = sphi 0, %s198
      %s213 = sphi 0, %s199
      %s217 = sphi 0, %s217
      %s219 = sphi 0, %s217
      %s220 = sphi 0, %s219
      %s234 = sphi 0, %s220
      %s238 = sphi 0, %s238
      %s240 = sphi 0, %s238
      %s241 = sphi 0, %s240
      %s255 = sphi 0, %s241
      %s259 = sphi 0, %s259
      %s261 = sphi 0, %s259
      %s262 = sphi 0, %s261
      %s276 = sphi 0, %s262
    $region4: #{tpu_custom_call.1} parent=1 // loop_header_branch
      %27 = sbr.rel (%p25) target = $region8
    $region5: #{tpu_custom_call.1} parent=1 // loop_body
      %s29 = ssub.s32 %s24, 1
      %s30 = ssub.s32 %s24, 2
      %s37 = sadd.s32 1, %s32
      %p38 = scmp.ge.s32.totalorder %s37, 2
      %s39 = scalar_select %p38, 0, %s37
      %s40 = sadd.s32 1, %s31
      %s41 = scalar_select %p38, %s40, %s31
      %p42 = scmp.ge.s32.totalorder %s41, 3
      %s43 = scalar_select %p42, 0, %s41
      %s44 = ssub.s32 %s32, %s39
      %p45 = scmp.eq.s32.totalorder %s44, 0
      %s47 = sadd.s32 %s46, 1
      %s48 = scalar_select %p45, %s46, %s47
      %p51 = pneg %p45
      %p52 = scmp.eq.s32.totalorder %s24, 5
      %p53 = por %p51, %p52
      %p54 = scmp.ne.s32.totalorder %s46, %s49
      %p55 = scmp.eq.s32.totalorder %s24, 0
      %p56 = por %p54, %p55
      %p57 = scmp.ne.s32.totalorder %s46, %s49
      %p58 = scmp.eq.s32.totalorder %s29, 5
      %p59 = por %p57, %p58
      %p60 = scmp.ne.s32.totalorder %s49, %s50
      %p61 = scmp.eq.s32.totalorder %s29, 0
      %p62 = por %p60, %p61
      %p63 = scmp.ne.s32.totalorder %s49, %s50
      %p64 = scmp.eq.s32.totalorder %s30, 5
      %p65 = por %p63, %p64
      %p67 = scmp.ne.s32.totalorder %s50, %s66
      %p68 = scmp.eq.s32.totalorder %s30, 0
      %p69 = por %p67, %p68
      %s71 = sadd.s32 %s70, 1
      %p74 = scmp.eq.s32.totalorder %s24, 5
      %p75 = scmp.ne.s32.totalorder %s70, %s72
      %p76 = scmp.eq.s32.totalorder %s24, 0
      %p77 = por %p75, %p76
      %p78 = scmp.ne.s32.totalorder %s70, %s72
      %p79 = scmp.eq.s32.totalorder %s29, 5
      %p80 = por %p78, %p79
      %p81 = scmp.ne.s32.totalorder %s72, %s73
      %p82 = scmp.eq.s32.totalorder %s29, 0
      %p83 = por %p81, %p82
      %p84 = scmp.ne.s32.totalorder %s72, %s73
      %p85 = scmp.eq.s32.totalorder %s30, 5
      %p86 = por %p84, %p85
      %p88 = scmp.ne.s32.totalorder %s73, %s87
      %p89 = scmp.eq.s32.totalorder %s30, 0
      %p90 = por %p88, %p89
      %s92 = sadd.s32 %s91, 1
      %p95 = scmp.eq.s32.totalorder %s24, 5
      %p96 = scmp.ne.s32.totalorder %s91, %s93
      %p97 = scmp.eq.s32.totalorder %s24, 0
      %p98 = por %p96, %p97
      %p99 = scmp.ne.s32.totalorder %s91, %s93
      %p100 = scmp.eq.s32.totalorder %s29, 5
      %p101 = por %p99, %p100
      %p102 = scmp.ne.s32.totalorder %s93, %s94
      %p103 = scmp.eq.s32.totalorder %s29, 0
      %p104 = por %p102, %p103
      %p105 = scmp.ne.s32.totalorder %s93, %s94
      %p106 = scmp.eq.s32.totalorder %s30, 5
      %p107 = por %p105, %p106
      %p109 = scmp.ne.s32.totalorder %s94, %s108
      %p110 = scmp.eq.s32.totalorder %s30, 0
      %p111 = por %p109, %p110
      %s113 = sadd.s32 %s112, 1
      %p116 = scmp.eq.s32.totalorder %s24, 5
      %p117 = scmp.ne.s32.totalorder %s112, %s114
      %p118 = scmp.eq.s32.totalorder %s24, 0
      %p119 = por %p117, %p118
      %p120 = scmp.ne.s32.totalorder %s112, %s114
      %p121 = scmp.eq.s32.totalorder %s29, 5
      %p122 = por %p120, %p121
      %p123 = scmp.ne.s32.totalorder %s114, %s115
      %p124 = scmp.eq.s32.totalorder %s29, 0
      %p125 = por %p123, %p124
      %p126 = scmp.ne.s32.totalorder %s114, %s115
      %p127 = scmp.eq.s32.totalorder %s30, 5
      %p128 = por %p126, %p127
      %p130 = scmp.ne.s32.totalorder %s115, %s129
      %p131 = scmp.eq.s32.totalorder %s30, 0
      %p132 = por %p130, %p131
      %s134 = sadd.s32 %s133, 1
      %p137 = scmp.eq.s32.totalorder %s24, 5
      %p138 = scmp.ne.s32.totalorder %s133, %s135
      %p139 = scmp.eq.s32.totalorder %s24, 0
      %p140 = por %p138, %p139
      %p141 = scmp.ne.s32.totalorder %s133, %s135
      %p142 = scmp.eq.s32.totalorder %s29, 5
      %p143 = por %p141, %p142
      %p144 = scmp.ne.s32.totalorder %s135, %s136
      %p145 = scmp.eq.s32.totalorder %s29, 0
      %p146 = por %p144, %p145
      %p147 = scmp.ne.s32.totalorder %s135, %s136
      %p148 = scmp.eq.s32.totalorder %s30, 5
      %p149 = por %p147, %p148
      %p151 = scmp.ne.s32.totalorder %s136, %s150
      %p152 = scmp.eq.s32.totalorder %s30, 0
      %p153 = por %p151, %p152
      %s155 = sadd.s32 %s154, 1
      %p158 = scmp.eq.s32.totalorder %s24, 5
      %p159 = scmp.ne.s32.totalorder %s154, %s156
      %p160 = scmp.eq.s32.totalorder %s24, 0
      %p161 = por %p159, %p160
      %p162 = scmp.ne.s32.totalorder %s154, %s156
      %p163 = scmp.eq.s32.totalorder %s29, 5
      %p164 = por %p162, %p163
      %p165 = scmp.ne.s32.totalorder %s156, %s157
      %p166 = scmp.eq.s32.totalorder %s29, 0
      %p167 = por %p165, %p166
      %p168 = scmp.ne.s32.totalorder %s156, %s157
      %p169 = scmp.eq.s32.totalorder %s30, 5
      %p170 = por %p168, %p169
      %p172 = scmp.ne.s32.totalorder %s157, %s171
      %p173 = scmp.eq.s32.totalorder %s30, 0
      %p174 = por %p172, %p173
      %s176 = sadd.s32 %s175, 1
      %p179 = scmp.eq.s32.totalorder %s24, 5
      %p180 = scmp.ne.s32.totalorder %s175, %s177
      %p181 = scmp.eq.s32.totalorder %s24, 0
      %p182 = por %p180, %p181
      %p183 = scmp.ne.s32.totalorder %s175, %s177
      %p184 = scmp.eq.s32.totalorder %s29, 5
      %p185 = por %p183, %p184
      %p186 = scmp.ne.s32.totalorder %s177, %s178
      %p187 = scmp.eq.s32.totalorder %s29, 0
      %p188 = por %p186, %p187
      %p189 = scmp.ne.s32.totalorder %s177, %s178
      %p190 = scmp.eq.s32.totalorder %s30, 5
      %p191 = por %p189, %p190
      %p193 = scmp.ne.s32.totalorder %s178, %s192
      %p194 = scmp.eq.s32.totalorder %s30, 0
      %p195 = por %p193, %p194
      %s197 = sadd.s32 %s196, 1
      %p200 = scmp.eq.s32.totalorder %s24, 5
      %p201 = scmp.ne.s32.totalorder %s196, %s198
      %p202 = scmp.eq.s32.totalorder %s24, 0
      %p203 = por %p201, %p202
      %p204 = scmp.ne.s32.totalorder %s196, %s198
      %p205 = scmp.eq.s32.totalorder %s29, 5
      %p206 = por %p204, %p205
      %p207 = scmp.ne.s32.totalorder %s198, %s199
      %p208 = scmp.eq.s32.totalorder %s29, 0
      %p209 = por %p207, %p208
      %p210 = scmp.ne.s32.totalorder %s198, %s199
      %p211 = scmp.eq.s32.totalorder %s30, 5
      %p212 = por %p210, %p211
      %p214 = scmp.ne.s32.totalorder %s199, %s213
      %p215 = scmp.eq.s32.totalorder %s30, 0
      %p216 = por %p214, %p215
      %s218 = sadd.s32 %s217, 1
      %p221 = scmp.eq.s32.totalorder %s24, 5
      %p222 = scmp.ne.s32.totalorder %s217, %s219
      %p223 = scmp.eq.s32.totalorder %s24, 0
      %p224 = por %p222, %p223
      %p225 = scmp.ne.s32.totalorder %s217, %s219
      %p226 = scmp.eq.s32.totalorder %s29, 5
      %p227 = por %p225, %p226
      %p228 = scmp.ne.s32.totalorder %s219, %s220
      %p229 = scmp.eq.s32.totalorder %s29, 0
      %p230 = por %p228, %p229
      %p231 = scmp.ne.s32.totalorder %s219, %s220
      %p232 = scmp.eq.s32.totalorder %s30, 5
      %p233 = por %p231, %p232
      %p235 = scmp.ne.s32.totalorder %s220, %s234
      %p236 = scmp.eq.s32.totalorder %s30, 0
      %p237 = por %p235, %p236
      %s239 = sadd.s32 %s238, 1
      %p242 = scmp.eq.s32.totalorder %s24, 5
      %p243 = scmp.ne.s32.totalorder %s238, %s240
      %p244 = scmp.eq.s32.totalorder %s24, 0
      %p245 = por %p243, %p244
      %p246 = scmp.ne.s32.totalorder %s238, %s240
      %p247 = scmp.eq.s32.totalorder %s29, 5
      %p248 = por %p246, %p247
      %p249 = scmp.ne.s32.totalorder %s240, %s241
      %p250 = scmp.eq.s32.totalorder %s29, 0
      %p251 = por %p249, %p250
      %p252 = scmp.ne.s32.totalorder %s240, %s241
      %p253 = scmp.eq.s32.totalorder %s30, 5
      %p254 = por %p252, %p253
      %p256 = scmp.ne.s32.totalorder %s241, %s255
      %p257 = scmp.eq.s32.totalorder %s30, 0
      %p258 = por %p256, %p257
      %s260 = sadd.s32 %s259, 1
      %p263 = scmp.eq.s32.totalorder %s24, 5
      %p264 = scmp.ne.s32.totalorder %s259, %s261
      %p265 = scmp.eq.s32.totalorder %s24, 0
      %p266 = por %p264, %p265
      %p267 = scmp.ne.s32.totalorder %s259, %s261
      %p268 = scmp.eq.s32.totalorder %s29, 5
      %p269 = por %p267, %p268
      %p270 = scmp.ne.s32.totalorder %s261, %s262
      %p271 = scmp.eq.s32.totalorder %s29, 0
      %p272 = por %p270, %p271
      %p273 = scmp.ne.s32.totalorder %s261, %s262
      %p274 = scmp.eq.s32.totalorder %s30, 5
      %p275 = por %p273, %p274
      %p277 = scmp.ne.s32.totalorder %s262, %s276
      %p278 = scmp.eq.s32.totalorder %s30, 0
      %p279 = por %p277, %p278
      %p280 = scmp.le.s32.totalorder 1, %s24
      %p281 = scmp.lt.s32.totalorder %s24, 7
      %p282 = pnand %p280, %p281
      %p283 = pneg %p282
      // Predicated region
      $region9: #{tpu_custom_call.1} parent=5 // pred_check
        _
      $region10: #{tpu_custom_call.1} parent=5 // pred_check_branch
        %285 = sbr.rel (%p282) target = $region12
      $region11: #{tpu_custom_call.1} parent=5 // pred_region
        %s286 = ssub.s32 %s24, 1
        // Predicated region
        $region13: #{tpu_custom_call.1} parent=11 // pred_check
          %p287 = pneg %p83
        $region14: #{tpu_custom_call.1} parent=11 // pred_check_branch
          %289 = sbr.rel (%p287) target = $region16
        $region15: #{tpu_custom_call.1} parent=11 // pred_region
          %s291 = ssub.s32 256, 256
          %292 = vsyncadd [#allocation7], %s291
          %s293 = sshll.u32 [#allocation6], 4
          %s294 = int_to_ptr.vmem [resolvable:$true] %s293
          %299 = dma.hbm_to_vmem [thread:$0]  %s1, 256, %s294, [#allocation7], 64, 64, 4
        $region16: #{tpu_custom_call.1} parent=11 // pred_fallthru
          _
        // Predicated region
        $region17: #{tpu_custom_call.1} parent=11 // pred_check
          %p300 = pneg %p104
        $region18: #{tpu_custom_call.1} parent=11 // pred_check_branch
          %302 = sbr.rel (%p300) target = $region20
        $region19: #{tpu_custom_call.1} parent=11 // pred_region
          _
        $region20: #{tpu_custom_call.1} parent=11 // pred_fallthru
          _
        // Predicated region
        $region21: #{tpu_custom_call.1} parent=11 // pred_check
          %p303 = pneg %p125
        $region22: #{tpu_custom_call.1} parent=11 // pred_check_branch
          %305 = sbr.rel (%p303) target = $region24
        $region23: #{tpu_custom_call.1} parent=11 // pred_region
          %s307 = ssub.s32 4096, 4096
          %308 = vsyncadd [#allocation7], %s307
          %s309 = sshll.u32 [#allocation8], 4
          %s310 = int_to_ptr.vmem [resolvable:$true] %s309
          %315 = dma.hbm_to_vmem [thread:$0]  %s3, 4096, %s310, [#allocation7], 128, 128, 8
        $region24: #{tpu_custom_call.1} parent=11 // pred_fallthru
          _
        // Predicated region
        $region25: #{tpu_custom_call.1} parent=11 // pred_check
          %p316 = pneg %p146
        $region26: #{tpu_custom_call.1} parent=11 // pred_check_branch
          %318 = sbr.rel (%p316) target = $region28
        $region27: #{tpu_custom_call.1} parent=11 // pred_region
          _
        $region28: #{tpu_custom_call.1} parent=11 // pred_fallthru
          _
        // Predicated region
        $region29: #{tpu_custom_call.1} parent=11 // pred_check
          %p319 = pneg %p167
        $region30: #{tpu_custom_call.1} parent=11 // pred_check_branch
          %321 = sbr.rel (%p319) target = $region32
        $region31: #{tpu_custom_call.1} parent=11 // pred_region
          %s323 = ssub.s32 12288, 12288
          %324 = vsyncadd [#allocation10], %s323
          %s325 = sshll.u32 [#allocation9], 4
          %s326 = int_to_ptr.vmem [resolvable:$true] %s325
          %331 = dma.hbm_to_vmem [thread:$0]  %s5, 12288, %s326, [#allocation10], 64, 64, 4
        $region32: #{tpu_custom_call.1} parent=11 // pred_fallthru
          _
        // Predicated region
        $region33: #{tpu_custom_call.1} parent=11 // pred_check
          %p332 = pneg %p188
        $region34: #{tpu_custom_call.1} parent=11 // pred_check_branch
          %334 = sbr.rel (%p332) target = $region36
        $region35: #{tpu_custom_call.1} parent=11 // pred_region
          _
        $region36: #{tpu_custom_call.1} parent=11 // pred_fallthru
          _
        // Predicated region
        $region37: #{tpu_custom_call.1} parent=11 // pred_check
          %p335 = pneg %p209
        $region38: #{tpu_custom_call.1} parent=11 // pred_check_branch
          %337 = sbr.rel (%p335) target = $region40
        $region39: #{tpu_custom_call.1} parent=11 // pred_region
          %s339 = ssub.s32 2048, 2048
          %340 = vsyncadd [#allocation10], %s339
          %s341 = sshll.u32 [#allocation11], 4
          %s342 = int_to_ptr.vmem [resolvable:$true] %s341
          %347 = dma.hbm_to_vmem [thread:$0]  %s7, 2048, %s342, [#allocation10], 128, 128, 8
        $region40: #{tpu_custom_call.1} parent=11 // pred_fallthru
          _
        // Predicated region
        $region41: #{tpu_custom_call.1} parent=11 // pred_check
          %p348 = pneg %p230
        $region42: #{tpu_custom_call.1} parent=11 // pred_check_branch
          %350 = sbr.rel (%p348) target = $region44
        $region43: #{tpu_custom_call.1} parent=11 // pred_region
          _
        $region44: #{tpu_custom_call.1} parent=11 // pred_fallthru
          _
      $region12: #{tpu_custom_call.1} parent=5 // pred_fallthru
        _
      %p351 = scmp.lt.s32.totalorder %s24, 6
      // Predicated region
      $region45: #{tpu_custom_call.1} parent=5 // pred_check
        %p352 = pneg %p351
      $region46: #{tpu_custom_call.1} parent=5 // pred_check_branch
        %354 = sbr.rel (%p352) target = $region48
      $region47: #{tpu_custom_call.1} parent=5 // pred_region
        // Predicated region
        $region49: #{tpu_custom_call.1} parent=47 // pred_check
          %p355 = pneg %p56
        $region50: #{tpu_custom_call.1} parent=47 // pred_check_branch
          %357 = sbr.rel (%p355) target = $region52
        $region51: #{tpu_custom_call.1} parent=47 // pred_region
          %s358 = sand.u32 %s46, 1
          %s359 = scalar_lea.sflag [#allocation4], %s358
          %s360 = sand.u32 %s46, 1
          %s361 = smul.addr %s360, 8
          %s362 = scalar_lea.vmem [#allocation3], %s361
          %s363 = smul.u32 2, %s32
          %s365 = ssub.s32 128, 128
          %366 = vsyncadd %s359, %s365
          %s367 = smul.addr %s363, 64
          %s368 = scalar_lea.hbm %s0, %s367
          %s369 = sshll.u32 %s362, 4
          %s370 = int_to_ptr.vmem [resolvable:$true] %s369
          %375 = dma.hbm_to_vmem [thread:$0]  %s368, 128, %s370, %s359, 64, 64, 4
        $region52: #{tpu_custom_call.1} parent=47 // pred_fallthru
          _
      $region48: #{tpu_custom_call.1} parent=5 // pred_fallthru
        _
      %p376 = scmp.le.s32.totalorder 1, %s24
      %p377 = scmp.lt.s32.totalorder %s24, 7
      %p378 = pnand %p376, %p377
      %p379 = pneg %p378
      // Predicated region
      $region53: #{tpu_custom_call.1} parent=5 // pred_check
        _
      $region54: #{tpu_custom_call.1} parent=5 // pred_check_branch
        %381 = sbr.rel (%p378) target = $region56
      $region55: #{tpu_custom_call.1} parent=5 // pred_region
        %s382 = ssub.s32 %s24, 1
        %s383 = sand.u32 %s49, 1
        %s384 = scalar_lea.sflag [#allocation4], %s383
        %s385 = sand.u32 %s49, 1
        %s386 = smul.addr %s385, 8
        %s387 = scalar_lea.vmem [#allocation3], %s386
        // Predicated region
        $region57: #{tpu_custom_call.1} parent=55 // pred_check
          %p388 = pneg %p62
        $region58: #{tpu_custom_call.1} parent=55 // pred_check_branch
          %390 = sbr.rel (%p388) target = $region60
        $region59: #{tpu_custom_call.1} parent=55 // pred_region
          %391 = dma.done %s384, 128
        $region60: #{tpu_custom_call.1} parent=55 // pred_fallthru
          _
        // Predicated region
        $region61: #{tpu_custom_call.1} parent=55 // pred_check
          %p392 = pneg %p83
        $region62: #{tpu_custom_call.1} parent=55 // pred_check_branch
          %394 = sbr.rel (%p392) target = $region64
        $region63: #{tpu_custom_call.1} parent=55 // pred_region
          %395 = dma.done [#allocation7], 256
        $region64: #{tpu_custom_call.1} parent=55 // pred_fallthru
          _
        // Predicated region
        $region65: #{tpu_custom_call.1} parent=55 // pred_check
          %p396 = pneg %p125
        $region66: #{tpu_custom_call.1} parent=55 // pred_check_branch
          %398 = sbr.rel (%p396) target = $region68
        $region67: #{tpu_custom_call.1} parent=55 // pred_region
          %399 = dma.done [#allocation7], 4096
        $region68: #{tpu_custom_call.1} parent=55 // pred_fallthru
          _
        // Predicated region
        $region69: #{tpu_custom_call.1} parent=55 // pred_check
          %p400 = pneg %p167
        $region70: #{tpu_custom_call.1} parent=55 // pred_check_branch
          %402 = sbr.rel (%p400) target = $region72
        $region71: #{tpu_custom_call.1} parent=55 // pred_region
          %403 = dma.done [#allocation10], 12288
        $region72: #{tpu_custom_call.1} parent=55 // pred_fallthru
          _
        // Predicated region
        $region73: #{tpu_custom_call.1} parent=55 // pred_check
          %p404 = pneg %p209
        $region74: #{tpu_custom_call.1} parent=55 // pred_check_branch
          %406 = sbr.rel (%p404) target = $region76
        $region75: #{tpu_custom_call.1} parent=55 // pred_region
          %407 = dma.done [#allocation10], 2048
        $region76: #{tpu_custom_call.1} parent=55 // pred_fallthru
          _
        %s408 = sand.u32 %s49, 1
        %s409 = scalar_lea.sflag [#allocation4], %s408
        %s410 = sand.u32 %s49, 1
        %s411 = smul.addr %s410, 8
        %s412 = scalar_lea.vmem [#allocation3], %s411
        %p413 = pneg %p62
        %p414 = pneg %p59
        %p415 = pneg %p83
        %p416 = pneg %p80
        %p417 = pneg %p104
        %p418 = pneg %p101
        %p419 = pneg %p125
        %p420 = pneg %p122
        %p421 = pneg %p146
        %p422 = pneg %p143
        %p423 = pneg %p167
        %p424 = pneg %p164
        %p425 = pneg %p188
        %p426 = pneg %p185
        %p427 = pneg %p209
        %p428 = pneg %p206
        %p429 = pneg %p230
        %p430 = pneg %p227
        %p431 = pneg %p251
        %p432 = pneg %p248
        %p433 = pneg %p272
        %p434 = pneg %p269
        %s435 = smul.u32 2, %s34
        %p437 = scmp.eq.s32.totalorder %s33, 0
        %p438 = scmp.eq.s32.totalorder %s34, 0
        %p439 = pnand %p437, %p438
        %p440 = pneg %p439
        // Predicated region
        $region77: #{tpu_custom_call.1} parent=55 // pred_check
          _
        $region78: #{tpu_custom_call.1} parent=55 // pred_check_branch
          %442 = sbr.rel (%p439) target = $region80
        $region79: #{tpu_custom_call.1} parent=55 // pred_region
          %v443 = vld [vmem:[#allocation6] sm:$0xf]
          %v444 = vld [vmem:[#allocation6 + $0x4] sm:$0xf]
          %v445 = vld [vmem:[#allocation6 + $0x8] sm:$0xf]
          %v446 = vld [vmem:[#allocation6 + $0xc] sm:$0xf]
          %v451 = vunpack.c.l.b16 %v443
          %v452 = vunpack.c.l.b16 %v444
          %v453 = vunpack.c.l.b16 %v445
          %v454 = vunpack.c.l.b16 %v446
          %v455 = vpack.c.b16 %v452, %v451
          %v456 = vpack.c.b16 %v454, %v453
          %459 = vst [vmem:[#allocation2] sm:$0xff] %v455
          %460 = vst [vmem:[#allocation2 + $0x8] sm:$0xff] %v456
          %v461 = vld [vmem:[#allocation8] sm:$0xff]
          %v462 = vld [vmem:[#allocation8 + $0x8] sm:$0xff]
          %v463 = vld [vmem:[#allocation8 + $0x10] sm:$0xff]
          %v464 = vld [vmem:[#allocation8 + $0x18] sm:$0xff]
          %v465 = vld [vmem:[#allocation8 + $0x20] sm:$0xff]
          %v466 = vld [vmem:[#allocation8 + $0x28] sm:$0xff]
          %v467 = vld [vmem:[#allocation8 + $0x30] sm:$0xff]
          %v468 = vld [vmem:[#allocation8 + $0x38] sm:$0xff]
          %v469 = vld [vmem:[#allocation8 + $0x40] sm:$0xff]
          %v470 = vld [vmem:[#allocation8 + $0x48] sm:$0xff]
          %v471 = vld [vmem:[#allocation8 + $0x50] sm:$0xff]
          %v472 = vld [vmem:[#allocation8 + $0x58] sm:$0xff]
          %v473 = vld [vmem:[#allocation8 + $0x60] sm:$0xff]
          %v474 = vld [vmem:[#allocation8 + $0x68] sm:$0xff]
          %v475 = vld [vmem:[#allocation8 + $0x70] sm:$0xff]
          %v476 = vld [vmem:[#allocation8 + $0x78] sm:$0xff]
          %v477 = vld [vmem:[#allocation8 + $0x80] sm:$0xff]
          %v478 = vld [vmem:[#allocation8 + $0x88] sm:$0xff]
          %v479 = vld [vmem:[#allocation8 + $0x90] sm:$0xff]
          %v480 = vld [vmem:[#allocation8 + $0x98] sm:$0xff]
          %v481 = vld [vmem:[#allocation8 + $0xa0] sm:$0xff]
          %v482 = vld [vmem:[#allocation8 + $0xa8] sm:$0xff]
          %v483 = vld [vmem:[#allocation8 + $0xb0] sm:$0xff]
          %v484 = vld [vmem:[#allocation8 + $0xb8] sm:$0xff]
          %v485 = vld [vmem:[#allocation8 + $0xc0] sm:$0xff]
          %v486 = vld [vmem:[#allocation8 + $0xc8] sm:$0xff]
          %v487 = vld [vmem:[#allocation8 + $0xd0] sm:$0xff]
          %v488 = vld [vmem:[#allocation8 + $0xd8] sm:$0xff]
          %v489 = vld [vmem:[#allocation8 + $0xe0] sm:$0xff]
          %v490 = vld [vmem:[#allocation8 + $0xe8] sm:$0xff]
          %v491 = vld [vmem:[#allocation8 + $0xf0] sm:$0xff]
          %v492 = vld [vmem:[#allocation8 + $0xf8] sm:$0xff]
          %v493 = vpack.c.bf16 %v462, %v461
          %v494 = vpack.c.bf16 %v464, %v463
          %v495 = vpack.c.bf16 %v466, %v465
          %v496 = vpack.c.bf16 %v468, %v467
          %v497 = vpack.c.bf16 %v470, %v469
          %v498 = vpack.c.bf16 %v472, %v471
          %v499 = vpack.c.bf16 %v474, %v473
          %v500 = vpack.c.bf16 %v476, %v475
          %v501 = vpack.c.bf16 %v478, %v477
          %v502 = vpack.c.bf16 %v480, %v479
          %v503 = vpack.c.bf16 %v482, %v481
          %v504 = vpack.c.bf16 %v484, %v483
          %v505 = vpack.c.bf16 %v486, %v485
          %v506 = vpack.c.bf16 %v488, %v487
          %v507 = vpack.c.bf16 %v490, %v489
          %v508 = vpack.c.bf16 %v492, %v491
          %v509 = vld [vmem:[#allocation11] sm:$0xff]
          %v510 = vld [vmem:[#allocation11 + $0x8] sm:$0xff]
          %v511 = vld [vmem:[#allocation11 + $0x10] sm:$0xff]
          %v512 = vld [vmem:[#allocation11 + $0x18] sm:$0xff]
          %v513 = vld [vmem:[#allocation11 + $0x20] sm:$0xff]
          %v514 = vld [vmem:[#allocation11 + $0x28] sm:$0xff]
          %v515 = vld [vmem:[#allocation11 + $0x30] sm:$0xff]
          %v516 = vld [vmem:[#allocation11 + $0x38] sm:$0xff]
          %v517 = vld [vmem:[#allocation11 + $0x40] sm:$0xff]
          %v518 = vld [vmem:[#allocation11 + $0x48] sm:$0xff]
          %v519 = vld [vmem:[#allocation11 + $0x50] sm:$0xff]
          %v520 = vld [vmem:[#allocation11 + $0x58] sm:$0xff]
          %v521 = vld [vmem:[#allocation11 + $0x60] sm:$0xff]
          %v522 = vld [vmem:[#allocation11 + $0x68] sm:$0xff]
          %v523 = vld [vmem:[#allocation11 + $0x70] sm:$0xff]
          %v524 = vld [vmem:[#allocation11 + $0x78] sm:$0xff]
          %v525 = vld [vmem:[%s8] sm:$0x3]
          %v527 = vlaneseq
          %v528 = vshrl.u32 %v527, 7
          %v529 = vsub.s32 0, %v528
          %v530 = vrot.slane %v525, %v529
          %v531 = vlaneseq
          %v532 = vshrl.u32 %v531, 7
          %v533 = vsub.s32 1, %v532
          %v534 = vrot.slane %v525, %v533
          %v553 = vunpack.c.l.b16 %v509
          %v554 = vunpack.c.h.b16 %v509
          %v555 = vunpack.c.l.b16 %v510
          %v556 = vunpack.c.h.b16 %v510
          %v557 = vunpack.c.l.b16 %v511
          %v558 = vunpack.c.h.b16 %v511
          %v559 = vunpack.c.l.b16 %v512
          %v560 = vunpack.c.h.b16 %v512
          %v561 = vunpack.c.l.b16 %v513
          %v562 = vunpack.c.h.b16 %v513
          %v563 = vunpack.c.l.b16 %v514
          %v564 = vunpack.c.h.b16 %v514
          %v565 = vunpack.c.l.b16 %v515
          %v566 = vunpack.c.h.b16 %v515
          %v567 = vunpack.c.l.b16 %v516
          %v568 = vunpack.c.h.b16 %v516
          %v569 = vunpack.c.l.b16 %v517
          %v570 = vunpack.c.h.b16 %v517
          %v571 = vunpack.c.l.b16 %v518
          %v572 = vunpack.c.h.b16 %v518
          %v573 = vunpack.c.l.b16 %v519
          %v574 = vunpack.c.h.b16 %v519
          %v575 = vunpack.c.l.b16 %v520
          %v576 = vunpack.c.h.b16 %v520
          %v577 = vunpack.c.l.b16 %v521
          %v578 = vunpack.c.h.b16 %v521
          %v579 = vunpack.c.l.b16 %v522
          %v580 = vunpack.c.h.b16 %v522
          %v581 = vunpack.c.l.b16 %v523
          %v582 = vunpack.c.h.b16 %v523
          %v583 = vunpack.c.l.b16 %v524
          %v584 = vunpack.c.h.b16 %v524
          %v585 = vpack.c.b16 %v555, %v553
          %v586 = vpack.c.b16 %v556, %v554
          %v587 = vpack.c.b16 %v559, %v557
          %v588 = vpack.c.b16 %v560, %v558
          %v589 = vpack.c.b16 %v563, %v561
          %v590 = vpack.c.b16 %v564, %v562
          %v591 = vpack.c.b16 %v567, %v565
          %v592 = vpack.c.b16 %v568, %v566
          %v593 = vpack.c.b16 %v571, %v569
          %v594 = vpack.c.b16 %v572, %v570
          %v595 = vpack.c.b16 %v575, %v573
          %v596 = vpack.c.b16 %v576, %v574
          %v597 = vpack.c.b16 %v579, %v577
          %v598 = vpack.c.b16 %v580, %v578
          %v599 = vpack.c.b16 %v583, %v581
          %v600 = vpack.c.b16 %v584, %v582
          %617 = vmatprep.subr.bf16.mxu0 %v586
          %618 = vmatpush1.bf16.msra.mxu0 %v585
          %619 = vmatprep.subr.bf16.mxu0 %v588
          %620 = vmatpush1.bf16.msra.mxu0 %v587
          %621 = vmatprep.subr.bf16.mxu0 %v590
          %622 = vmatpush1.bf16.msra.mxu0 %v589
          %623 = vmatprep.subr.bf16.mxu0 %v592
          %624 = vmatpush1.bf16.msra.mxu0 %v591
          %625 = vmatprep.subr.bf16.mxu0 %v594
          %626 = vmatpush1.bf16.msra.mxu0 %v593
          %627 = vmatprep.subr.bf16.mxu0 %v596
          %628 = vmatpush1.bf16.msra.mxu0 %v595
          %629 = vmatprep.subr.bf16.mxu0 %v598
          %630 = vmatpush1.bf16.msra.mxu0 %v597
          %631 = vmatprep.subr.bf16.mxu0 %v600
          %632 = vmatpush1.bf16.msra.mxu0 %v599
          %633 = vmatprep.subr.bf16.mxu0 0
          %634 = vmatpush1.bf16.msra.mxu0 0
          %635 = vmatprep.subr.bf16.mxu0 0
          %636 = vmatpush1.bf16.msra.mxu0 0
          %637 = vmatprep.subr.bf16.mxu0 0
          %638 = vmatpush1.bf16.msra.mxu0 0
          %639 = vmatprep.subr.bf16.mxu0 0
          %640 = vmatpush1.bf16.msra.mxu0 0
          %641 = vmatprep.subr.bf16.mxu0 0
          %642 = vmatpush1.bf16.msra.mxu0 0
          %643 = vmatprep.subr.bf16.mxu0 0
          %644 = vmatpush1.bf16.msra.mxu0 0
          %645 = vmatprep.subr.bf16.mxu0 0
          %646 = vmatpush1.bf16.msra.mxu0 0
          %647 = vmatprep.subr.bf16.mxu0 0
          %648 = vmatpush1.bf16.msra.mxu0 0
          %649 = vmatprep.mubr.bf16.mxu0 0
          %650 = vmatmul.mubr.bf16.gmra.mrb[0].mxu0 %v493
          %v651 = vpop.f32.mrb[0].mxu0
          %v652 = vadd.f32 %v530, %v651
          %v653 = vpop.f32.mrb[0].mxu0
          %v654 = vadd.f32 %v534, %v653
          %v655 = vpop.f32.mrb[0].mxu0
          %v656 = vadd.f32 %v530, %v655
          %v657 = vpop.f32.mrb[0].mxu0
          %v658 = vadd.f32 %v534, %v657
          %659 = vmatprep.mubr.bf16.mxu0 0
          %660 = vmatmul.mubr.bf16.gmra.mrb[0].mxu0 %v494
          %v661 = vpop.f32.mrb[0].mxu0
          %v662 = vadd.f32 %v530, %v661
          %v663 = vpop.f32.mrb[0].mxu0
          %v664 = vadd.f32 %v534, %v663
          %v665 = vpop.f32.mrb[0].mxu0
          %v666 = vadd.f32 %v530, %v665
          %v667 = vpop.f32.mrb[0].mxu0
          %v668 = vadd.f32 %v534, %v667
          %669 = vmatprep.mubr.bf16.mxu0 0
          %670 = vmatmul.mubr.bf16.gmra.mrb[0].mxu0 %v495
          %v671 = vpop.f32.mrb[0].mxu0
          %v672 = vadd.f32 %v530, %v671
          %v673 = vpop.f32.mrb[0].mxu0
          %v674 = vadd.f32 %v534, %v673
          %v675 = vpop.f32.mrb[0].mxu0
          %v676 = vadd.f32 %v530, %v675
          %v677 = vpop.f32.mrb[0].mxu0
          %v678 = vadd.f32 %v534, %v677
          %679 = vmatprep.mubr.bf16.mxu0 0
          %680 = vmatmul.mubr.bf16.gmra.mrb[0].mxu0 %v496
          %v681 = vpop.f32.mrb[0].mxu0
          %v682 = vadd.f32 %v530, %v681
          %v683 = vpop.f32.mrb[0].mxu0
          %v684 = vadd.f32 %v534, %v683
          %v685 = vpop.f32.mrb[0].mxu0
          %v686 = vadd.f32 %v530, %v685
          %v687 = vpop.f32.mrb[0].mxu0
          %v688 = vadd.f32 %v534, %v687
          %689 = vmatprep.mubr.bf16.mxu0 0
          %690 = vmatmul.mubr.bf16.gmra.mrb[0].mxu0 %v497
          %v691 = vpop.f32.mrb[0].mxu0
          %v692 = vadd.f32 %v530, %v691
          %v693 = vpop.f32.mrb[0].mxu0
          %v694 = vadd.f32 %v534, %v693
          %v695 = vpop.f32.mrb[0].mxu0
          %v696 = vadd.f32 %v530, %v695
          %v697 = vpop.f32.mrb[0].mxu0
          %v698 = vadd.f32 %v534, %v697
          %699 = vmatprep.mubr.bf16.mxu0 0
          %700 = vmatmul.mubr.bf16.gmra.mrb[0].mxu0 %v498
          %v701 = vpop.f32.mrb[0].mxu0
          %v702 = vadd.f32 %v530, %v701
          %v703 = vpop.f32.mrb[0].mxu0
          %v704 = vadd.f32 %v534, %v703
          %v705 = vpop.f32.mrb[0].mxu0
          %v706 = vadd.f32 %v530, %v705
          %v707 = vpop.f32.mrb[0].mxu0
          %v708 = vadd.f32 %v534, %v707
          %709 = vmatprep.mubr.bf16.mxu0 0
          %710 = vmatmul.mubr.bf16.gmra.mrb[0].mxu0 %v499
          %v711 = vpop.f32.mrb[0].mxu0
          %v712 = vadd.f32 %v530, %v711
          %v713 = vpop.f32.mrb[0].mxu0
          %v714 = vadd.f32 %v534, %v713
          %v715 = vpop.f32.mrb[0].mxu0
          %v716 = vadd.f32 %v530, %v715
          %v717 = vpop.f32.mrb[0].mxu0
          %v718 = vadd.f32 %v534, %v717
          %719 = vmatprep.mubr.bf16.mxu0 0
          %720 = vmatmul.mubr.bf16.gmra.mrb[0].mxu0 %v500
          %v721 = vpop.f32.mrb[0].mxu0
          %v722 = vadd.f32 %v530, %v721
          %v723 = vpop.f32.mrb[0].mxu0
          %v724 = vadd.f32 %v534, %v723
          %v725 = vpop.f32.mrb[0].mxu0
          %v726 = vadd.f32 %v530, %v725
          %v727 = vpop.f32.mrb[0].mxu0
          %v728 = vadd.f32 %v534, %v727
          %729 = vmatprep.mubr.bf16.mxu0 0
          %730 = vmatmul.mubr.bf16.gmra.mrb[0].mxu0 %v501
          %v731 = vpop.f32.mrb[0].mxu0
          %v732 = vadd.f32 %v530, %v731
          %v733 = vpop.f32.mrb[0].mxu0
          %v734 = vadd.f32 %v534, %v733
          %v735 = vpop.f32.mrb[0].mxu0
          %v736 = vadd.f32 %v530, %v735
          %v737 = vpop.f32.mrb[0].mxu0
          %v738 = vadd.f32 %v534, %v737
          %739 = vmatprep.mubr.bf16.mxu0 0
          %740 = vmatmul.mubr.bf16.gmra.mrb[0].mxu0 %v502
          %v741 = vpop.f32.mrb[0].mxu0
          %v742 = vadd.f32 %v530, %v741
          %v743 = vpop.f32.mrb[0].mxu0
          %v744 = vadd.f32 %v534, %v743
          %v745 = vpop.f32.mrb[0].mxu0
          %v746 = vadd.f32 %v530, %v745
          %v747 = vpop.f32.mrb[0].mxu0
          %v748 = vadd.f32 %v534, %v747
          %749 = vmatprep.mubr.bf16.mxu0 0
          %750 = vmatmul.mubr.bf16.gmra.mrb[0].mxu0 %v503
          %v751 = vpop.f32.mrb[0].mxu0
          %v752 = vadd.f32 %v530, %v751
          %v753 = vpop.f32.mrb[0].mxu0
          %v754 = vadd.f32 %v534, %v753
          %v755 = vpop.f32.mrb[0].mxu0
          %v756 = vadd.f32 %v530, %v755
          %v757 = vpop.f32.mrb[0].mxu0
          %v758 = vadd.f32 %v534, %v757
          %759 = vmatprep.mubr.bf16.mxu0 0
          %760 = vmatmul.mubr.bf16.gmra.mrb[0].mxu0 %v504
          %v761 = vpop.f32.mrb[0].mxu0
          %v762 = vadd.f32 %v530, %v761
          %v763 = vpop.f32.mrb[0].mxu0
          %v764 = vadd.f32 %v534, %v763
          %v765 = vpop.f32.mrb[0].mxu0
          %v766 = vadd.f32 %v530, %v765
          %v767 = vpop.f32.mrb[0].mxu0
          %v768 = vadd.f32 %v534, %v767
          %769 = vmatprep.mubr.bf16.mxu0 0
          %770 = vmatmul.mubr.bf16.gmra.mrb[0].mxu0 %v505
          %v771 = vpop.f32.mrb[0].mxu0
          %v772 = vadd.f32 %v530, %v771
          %v773 = vpop.f32.mrb[0].mxu0
          %v774 = vadd.f32 %v534, %v773
          %v775 = vpop.f32.mrb[0].mxu0
          %v776 = vadd.f32 %v530, %v775
          %v777 = vpop.f32.mrb[0].mxu0
          %v778 = vadd.f32 %v534, %v777
          %779 = vmatprep.mubr.bf16.mxu0 0
          %780 = vmatmul.mubr.bf16.gmra.mrb[0].mxu0 %v506
          %v781 = vpop.f32.mrb[0].mxu0
          %v782 = vadd.f32 %v530, %v781
          %v783 = vpop.f32.mrb[0].mxu0
          %v784 = vadd.f32 %v534, %v783
          %v785 = vpop.f32.mrb[0].mxu0
          %v786 = vadd.f32 %v530, %v785
          %v787 = vpop.f32.mrb[0].mxu0
          %v788 = vadd.f32 %v534, %v787
          %789 = vmatprep.mubr.bf16.mxu0 0
          %790 = vmatmul.mubr.bf16.gmra.mrb[0].mxu0 %v507
          %v791 = vpop.f32.mrb[0].mxu0
          %v792 = vadd.f32 %v530, %v791
          %v793 = vpop.f32.mrb[0].mxu0
          %v794 = vadd.f32 %v534, %v793
          %v795 = vpop.f32.mrb[0].mxu0
          %v796 = vadd.f32 %v530, %v795
          %v797 = vpop.f32.mrb[0].mxu0
          %v798 = vadd.f32 %v534, %v797
          %799 = vmatprep.mubr.bf16.mxu0 0
          %800 = vmatmul.mubr.bf16.gmra.mrb[0].mxu0 %v508
          %v801 = vpop.f32.mrb[0].mxu0
          %v802 = vadd.f32 %v530, %v801
          %v803 = vpop.f32.mrb[0].mxu0
          %v804 = vadd.f32 %v534, %v803
          %v805 = vpop.f32.mrb[0].mxu0
          %v806 = vadd.f32 %v530, %v805
          %v807 = vpop.f32.mrb[0].mxu0
          %v808 = vadd.f32 %v534, %v807
          %809 = vdwg.mxu0
          %v810 = vpack.c.bf16 %v461, %v461
          %v811 = vpack.c.bf16 %v477, %v477
          %s812 = scalar_lea.vmem [#allocation9], 512
          %v813 = vld [vmem:[%s812] sm:$0xf]
          %v814 = vld [vmem:[%s812 + $0x4] sm:$0xf]
          %v815 = vld [vmem:[%s812 + $0x8] sm:$0xf]
          %v816 = vld [vmem:[%s812 + $0xc] sm:$0xf]
          %v817 = vld [vmem:[%s812 + $0x10] sm:$0xf]
          %v818 = vld [vmem:[%s812 + $0x14] sm:$0xf]
          %v819 = vld [vmem:[%s812 + $0x18] sm:$0xf]
          %v820 = vld [vmem:[%s812 + $0x1c] sm:$0xf]
          %v821 = vld [vmem:[%s812 + $0x20] sm:$0xf]
          %v822 = vld [vmem:[%s812 + $0x24] sm:$0xf]
          %v823 = vld [vmem:[%s812 + $0x28] sm:$0xf]
          %v824 = vld [vmem:[%s812 + $0x2c] sm:$0xf]
          %v825 = vld [vmem:[%s812 + $0x30] sm:$0xf]
          %v826 = vld [vmem:[%s812 + $0x34] sm:$0xf]
          %v827 = vld [vmem:[%s812 + $0x38] sm:$0xf]
          %v828 = vld [vmem:[%s812 + $0x3c] sm:$0xf]
          %v829 = vld [vmem:[%s6 + $0x8] sm:$0x1]
          %v830 = vlaneseq
          %v831 = vshrl.u32 %v830, 7
          %v832 = vsub.s32 0, %v831
          %v833 = vrot.slane %v829, %v832
          %v836 = vunpack.c.l.b16 %v810
          %v837 = vunpack.c.l.b16 %v811
          %v838 = vrot.slane %v837, 7
          %vm839 = vcmask 1041409
          %v840 = vsel %vm839, %v838, %v836
          %v841 = vpack.c.b16 %v840, %v840
          %v859 = vunpack.c.l.b16 %v813
          %v860 = vunpack.c.l.b16 %v814
          %v861 = vunpack.c.l.b16 %v815
          %v862 = vunpack.c.l.b16 %v816
          %v863 = vunpack.c.l.b16 %v817
          %v864 = vunpack.c.l.b16 %v818
          %v865 = vunpack.c.l.b16 %v819
          %v866 = vunpack.c.l.b16 %v820
          %v867 = vunpack.c.l.b16 %v821
          %v868 = vunpack.c.l.b16 %v822
          %v869 = vunpack.c.l.b16 %v823
          %v870 = vunpack.c.l.b16 %v824
          %v871 = vunpack.c.l.b16 %v825
          %v872 = vunpack.c.l.b16 %v826
          %v873 = vunpack.c.l.b16 %v827
          %v874 = vunpack.c.l.b16 %v828
          %v875 = vpack.c.b16 %v860, %v859
          %v876 = vpack.c.b16 %v862, %v861
          %v877 = vpack.c.b16 %v864, %v863
          %v878 = vpack.c.b16 %v866, %v865
          %v879 = vpack.c.b16 %v868, %v867
          %v880 = vpack.c.b16 %v870, %v869
          %v881 = vpack.c.b16 %v872, %v871
          %v882 = vpack.c.b16 %v874, %v873
          %891 = vmatprep.subr.bf16.mxu0 0
          %892 = vmatpush1.bf16.msra.mxu0 %v875
          %893 = vmatprep.subr.bf16.mxu0 0
          %894 = vmatpush1.bf16.msra.mxu0 %v876
          %895 = vmatprep.subr.bf16.mxu0 0
          %896 = vmatpush1.bf16.msra.mxu0 %v877
          %897 = vmatprep.subr.bf16.mxu0 0
          %898 = vmatpush1.bf16.msra.mxu0 %v878
          %899 = vmatprep.subr.bf16.mxu0 0
          %900 = vmatpush1.bf16.msra.mxu0 %v879
          %901 = vmatprep.subr.bf16.mxu0 0
          %902 = vmatpush1.bf16.msra.mxu0 %v880
          %903 = vmatprep.subr.bf16.mxu0 0
          %904 = vmatpush1.bf16.msra.mxu0 %v881
          %905 = vmatprep.subr.bf16.mxu0 0
          %906 = vmatpush1.bf16.msra.mxu0 %v882
          %907 = vmatprep.subr.bf16.mxu0 0
          %908 = vmatpush1.bf16.msra.mxu0 0
          %909 = vmatprep.subr.bf16.mxu0 0
          %910 = vmatpush1.bf16.msra.mxu0 0
          %911 = vmatprep.subr.bf16.mxu0 0
          %912 = vmatpush1.bf16.msra.mxu0 0
          %913 = vmatprep.subr.bf16.mxu0 0
          %914 = vmatpush1.bf16.msra.mxu0 0
          %915 = vmatprep.subr.bf16.mxu0 0
          %916 = vmatpush1.bf16.msra.mxu0 0
          %917 = vmatprep.subr.bf16.mxu0 0
          %918 = vmatpush1.bf16.msra.mxu0 0
          %919 = vmatprep.subr.bf16.mxu0 0
          %920 = vmatpush1.bf16.msra.mxu0 0
          %921 = vmatprep.subr.bf16.mxu0 0
          %922 = vmatpush1.bf16.msra.mxu0 0
          %923 = vmatprep.mubr.bf16.mxu0 0
          %924 = vmatmul.mubr.bf16.gmra.mrb[0].mxu0 %v841
          %v925 = vpop.f32.mrb[0].mxu0
          %v926 = vadd.f32 %v833, %v925
          %v927 = vpop.f32.mrb[0].mxu0
          %v928 = vpop.f32.mrb[0].mxu0
          %v929 = vpop.f32.mrb[0].mxu0
          %930 = vdwg.mxu0
          %v933 = vunpack.c.l.s4 1966171168
          %v934 = vunpack.c.0.s8 %v933
          %v935 = vlaneseq
          %v936 = vshrl.u32 %v935, 7
          %v937 = vsub.s32 %v934, %v936
          %v938 = vrot.slane %v926, %v937
          %v939 = vcombine.high %v938, %v938
          %v941 = vunpack.c.l.s4 1966171168
          %v942 = vunpack.c.0.s8 %v941
          %v943 = vlaneseq
          %v944 = vshrl.u32 %v943, 7
          %v945 = vsub.s32 %v942, %v944
          %v946 = vrot.slane %v938, %v945
          %v948 = vunpack.c.l.s4 1966171168
          %v949 = vunpack.c.0.s8 %v948
          %v950 = vlaneseq
          %v951 = vshrl.u32 %v950, 7
          %v952 = vsub.s32 %v949, %v951
          %v953 = vrot.slane %v939, %v952
          %956 = vmatprep.subr.mxu0 0.0
          %957 = vmatpush1.xpose.msra.mxu0 %v652
          %958 = vmatprep.subr.mxu0 0.0
          %959 = vmatpush1.xpose.msra.mxu0 %v656
          %960 = vmatprep.subr.mxu0 0.0
          %961 = vmatpush1.xpose.msra.mxu0 %v662
          %962 = vmatprep.subr.mxu0 0.0
          %963 = vmatpush1.xpose.msra.mxu0 %v666
          %964 = vmatprep.subr.mxu0 0.0
          %965 = vmatpush1.xpose.msra.mxu0 %v672
          %966 = vmatprep.subr.mxu0 0.0
          %967 = vmatpush1.xpose.msra.mxu0 %v676
          %968 = vmatprep.subr.mxu0 0.0
          %969 = vmatpush1.xpose.msra.mxu0 %v682
          %970 = vmatprep.subr.mxu0 0.0
          %971 = vmatpush1.xpose.msra.mxu0 %v686
          %972 = vmatprep.subr.mxu0 0.0
          %973 = vmatpush1.xpose.msra.mxu0 %v692
          %974 = vmatprep.subr.mxu0 0.0
          %975 = vmatpush1.xpose.msra.mxu0 %v696
          %976 = vmatprep.subr.mxu0 0.0
          %977 = vmatpush1.xpose.msra.mxu0 %v702
          %978 = vmatprep.subr.mxu0 0.0
          %979 = vmatpush1.xpose.msra.mxu0 %v706
          %980 = vmatprep.subr.mxu0 0.0
          %981 = vmatpush1.xpose.msra.mxu0 %v712
          %982 = vmatprep.subr.mxu0 0.0
          %983 = vmatpush1.xpose.msra.mxu0 %v716
          %984 = vmatprep.subr.mxu0 0.0
          %985 = vmatpush1.xpose.msra.mxu0 %v722
          %986 = vmatprep.subr.mxu0 0.0
          %987 = vmatpush1.xpose.msra.mxu0 %v726
          %988 = vmatprep.subr.mxu0 0.0
          %989 = vmatpush1.xpose.msra.mxu0 0.0
          %990 = vmatprep.subr.mxu0 0.0
          %991 = vmatpush1.xpose.msra.mxu0 0.0
          %992 = vmatprep.subr.mxu0 0.0
          %993 = vmatpush1.xpose.msra.mxu0 0.0
          %994 = vmatprep.subr.mxu0 0.0
          %995 = vmatpush1.xpose.msra.mxu0 0.0
          %996 = vmatprep.subr.mxu0 0.0
          %997 = vmatpush1.xpose.msra.mxu0 0.0
          %998 = vmatprep.subr.mxu0 0.0
          %999 = vmatpush1.xpose.msra.mxu0 0.0
          %1000 = vmatprep.subr.mxu0 0.0
          %1001 = vmatpush1.xpose.msra.mxu0 0.0
          %1002 = vmatprep.subr.mxu0 0.0
          %1003 = vmatpush1.xpose.msra.mxu0 0.0
          %1004 = vmatprep.subr.mxu0 0.0
          %1005 = vmatpush1.xpose.msra.mxu0 0.0
          %1006 = vmatprep.subr.mxu0 0.0
          %1007 = vmatpush1.xpose.msra.mxu0 0.0
          %1008 = vmatprep.subr.mxu0 0.0
          %1009 = vmatpush1.xpose.msra.mxu0 0.0
          %1010 = vmatprep.subr.mxu0 0.0
          %1011 = vmatpush1.xpose.msra.mxu0 0.0
          %1012 = vmatprep.subr.mxu0 0.0
          %1013 = vmatpush1.xpose.msra.mxu0 0.0
          %1014 = vmatprep.subr.mxu0 0.0
          %1015 = vmatpush1.xpose.msra.mxu0 0.0
          %1016 = vmatprep.subr.mxu0 0.0
          %1017 = vmatpush1.xpose.msra.mxu0 0.0
          %1018 = vmatprep.subr.mxu0 0.0
          %1019 = vmatpush1.xpose.msra.mxu0 0.0
          %1020 = vmatprep.mubr.f32.mxu0 0.0
          %1021 = vmatmul.mubr.f32.gmra.mrb[0].mxu0 %v946
          %v1022 = vpop.f32.mrb[0].mxu0
          %v1023 = vadd.f32 0.0, %v1022
          %v1024 = vpop.f32.mrb[0].mxu0
          %1025 = vdwg.mxu0
          %1026 = vmatprep.subr.mxu0 0.0
          %1027 = vmatpush1.xpose.msra.mxu0 %v732
          %1028 = vmatprep.subr.mxu0 0.0
          %1029 = vmatpush1.xpose.msra.mxu0 %v736
          %1030 = vmatprep.subr.mxu0 0.0
          %1031 = vmatpush1.xpose.msra.mxu0 %v742
          %1032 = vmatprep.subr.mxu0 0.0
          %1033 = vmatpush1.xpose.msra.mxu0 %v746
          %1034 = vmatprep.subr.mxu0 0.0
          %1035 = vmatpush1.xpose.msra.mxu0 %v752
          %1036 = vmatprep.subr.mxu0 0.0
          %1037 = vmatpush1.xpose.msra.mxu0 %v756
          %1038 = vmatprep.subr.mxu0 0.0
          %1039 = vmatpush1.xpose.msra.mxu0 %v762
          %1040 = vmatprep.subr.mxu0 0.0
          %1041 = vmatpush1.xpose.msra.mxu0 %v766
          %1042 = vmatprep.subr.mxu0 0.0
          %1043 = vmatpush1.xpose.msra.mxu0 %v772
          %1044 = vmatprep.subr.mxu0 0.0
          %1045 = vmatpush1.xpose.msra.mxu0 %v776
          %1046 = vmatprep.subr.mxu0 0.0
          %1047 = vmatpush1.xpose.msra.mxu0 %v782
          %1048 = vmatprep.subr.mxu0 0.0
          %1049 = vmatpush1.xpose.msra.mxu0 %v786
          %1050 = vmatprep.subr.mxu0 0.0
          %1051 = vmatpush1.xpose.msra.mxu0 %v792
          %1052 = vmatprep.subr.mxu0 0.0
          %1053 = vmatpush1.xpose.msra.mxu0 %v796
          %1054 = vmatprep.subr.mxu0 0.0
          %1055 = vmatpush1.xpose.msra.mxu0 %v802
          %1056 = vmatprep.subr.mxu0 0.0
          %1057 = vmatpush1.xpose.msra.mxu0 %v806
          %1058 = vmatprep.subr.mxu0 0.0
          %1059 = vmatpush1.xpose.msra.mxu0 0.0
          %1060 = vmatprep.subr.mxu0 0.0
          %1061 = vmatpush1.xpose.msra.mxu0 0.0
          %1062 = vmatprep.subr.mxu0 0.0
          %1063 = vmatpush1.xpose.msra.mxu0 0.0
          %1064 = vmatprep.subr.mxu0 0.0
          %1065 = vmatpush1.xpose.msra.mxu0 0.0
          %1066 = vmatprep.subr.mxu0 0.0
          %1067 = vmatpush1.xpose.msra.mxu0 0.0
          %1068 = vmatprep.subr.mxu0 0.0
          %1069 = vmatpush1.xpose.msra.mxu0 0.0
          %1070 = vmatprep.subr.mxu0 0.0
          %1071 = vmatpush1.xpose.msra.mxu0 0.0
          %1072 = vmatprep.subr.mxu0 0.0
          %1073 = vmatpush1.xpose.msra.mxu0 0.0
          %1074 = vmatprep.subr.mxu0 0.0
          %1075 = vmatpush1.xpose.msra.mxu0 0.0
          %1076 = vmatprep.subr.mxu0 0.0
          %1077 = vmatpush1.xpose.msra.mxu0 0.0
          %1078 = vmatprep.subr.mxu0 0.0
          %1079 = vmatpush1.xpose.msra.mxu0 0.0
          %1080 = vmatprep.subr.mxu0 0.0
          %1081 = vmatpush1.xpose.msra.mxu0 0.0
          %1082 = vmatprep.subr.mxu0 0.0
          %1083 = vmatpush1.xpose.msra.mxu0 0.0
          %1084 = vmatprep.subr.mxu0 0.0
          %1085 = vmatpush1.xpose.msra.mxu0 0.0
          %1086 = vmatprep.subr.mxu0 0.0
          %1087 = vmatpush1.xpose.msra.mxu0 0.0
          %1088 = vmatprep.subr.mxu0 0.0
          %1089 = vmatpush1.xpose.msra.mxu0 0.0
          %1090 = vmatprep.mubr.f32.mxu0 0.0
          %1091 = vmatmul.mubr.f32.gmra.mrb[0].mxu0 %v953
          %v1092 = vpop.f32.mrb[0].mxu0
          %v1093 = vadd.f32 0.0, %v1092
          %v1094 = vpop.f32.mrb[0].mxu0
          %1095 = vdwg.mxu0
          %v1096 = vmul.f32 %v1023, 0.17677669
          %v1097 = vmul.f32 %v1093, 0.17677669
          %v1098 = vld [vmem:[%s4] sm:$0x1]
          %v1099 = vld [vmem:[%s4 + $0x1] sm:$0x1]
          %v1100 = vadd.f32 %v1096, %v1098
          %v1101 = vadd.f32 %v1097, %v1099
          %vm1102 = vcmask 1040384
          %v1103 = vsel %vm1102, %v1100, -inf
          %1104 = vmax.xlane.f32.xlu0 %v1103
          %v1105 = vpop.xlane.xlu0 %1104
          %v1106 = vsel %vm1102, %v1101, -inf
          %1107 = vmax.xlane.f32.xlu0 %v1106
          %v1108 = vpop.xlane.xlu0 %1107
          %v1109 = vsub.f32 %v1100, %v1105
          %v1110 = vsub.f32 %v1101, %v1108
          %v1111 = vmul.f32 %v1109, 1.442695
          %v1112 = vpow.pop %v1111
          %v1113 = vmul.f32 %v1110, 1.442695
          %v1114 = vpow.pop %v1113
          %v1115 = vsel %vm1102, %v1112, 0.0
          %1116 = vadd.xlane.f32.xlu0 %v1115
          %v1117 = vpop.xlane.xlu0 %1116
          %v1118 = vsel %vm1102, %v1114, 0.0
          %1119 = vadd.xlane.f32.xlu0 %v1118
          %v1120 = vpop.xlane.xlu0 %1119
          %v1121 = vrcp.pop %v1117
          %v1122 = vrcp.pop %v1120
          %v1123 = vmul.f32 %v1112, %v1121
          %v1124 = vmul.f32 %v1114, %v1122
          %1125 = vmatprep.subr.mxu0 0.0
          %1126 = vmatpush1.msra.mxu0 %v654
          %1127 = vmatprep.subr.mxu0 0.0
          %1128 = vmatpush1.msra.mxu0 %v658
          %1129 = vmatprep.subr.mxu0 0.0
          %1130 = vmatpush1.msra.mxu0 %v664
          %1131 = vmatprep.subr.mxu0 0.0
          %1132 = vmatpush1.msra.mxu0 %v668
          %1133 = vmatprep.subr.mxu0 0.0
          %1134 = vmatpush1.msra.mxu0 %v674
          %1135 = vmatprep.subr.mxu0 0.0
          %1136 = vmatpush1.msra.mxu0 %v678
          %1137 = vmatprep.subr.mxu0 0.0
          %1138 = vmatpush1.msra.mxu0 %v684
          %1139 = vmatprep.subr.mxu0 0.0
          %1140 = vmatpush1.msra.mxu0 %v688
          %1141 = vmatprep.subr.mxu0 0.0
          %1142 = vmatpush1.msra.mxu0 %v694
          %1143 = vmatprep.subr.mxu0 0.0
          %1144 = vmatpush1.msra.mxu0 %v698
          %1145 = vmatprep.subr.mxu0 0.0
          %1146 = vmatpush1.msra.mxu0 %v704
          %1147 = vmatprep.subr.mxu0 0.0
          %1148 = vmatpush1.msra.mxu0 %v708
          %1149 = vmatprep.subr.mxu0 0.0
          %1150 = vmatpush1.msra.mxu0 %v714
          %1151 = vmatprep.subr.mxu0 0.0
          %1152 = vmatpush1.msra.mxu0 %v718
          %1153 = vmatprep.subr.mxu0 0.0
          %1154 = vmatpush1.msra.mxu0 %v724
          %1155 = vmatprep.subr.mxu0 0.0
          %1156 = vmatpush1.msra.mxu0 %v728
          %1157 = vmatprep.subr.mxu0 0.0
          %1158 = vmatpush1.msra.mxu0 0.0
          %1159 = vmatprep.subr.mxu0 0.0
          %1160 = vmatpush1.msra.mxu0 0.0
          %1161 = vmatprep.subr.mxu0 0.0
          %1162 = vmatpush1.msra.mxu0 0.0
          %1163 = vmatprep.subr.mxu0 0.0
          %1164 = vmatpush1.msra.mxu0 0.0
          %1165 = vmatprep.subr.mxu0 0.0
          %1166 = vmatpush1.msra.mxu0 0.0
          %1167 = vmatprep.subr.mxu0 0.0
          %1168 = vmatpush1.msra.mxu0 0.0
          %1169 = vmatprep.subr.mxu0 0.0
          %1170 = vmatpush1.msra.mxu0 0.0
          %1171 = vmatprep.subr.mxu0 0.0
          %1172 = vmatpush1.msra.mxu0 0.0
          %1173 = vmatprep.subr.mxu0 0.0
          %1174 = vmatpush1.msra.mxu0 0.0
          %1175 = vmatprep.subr.mxu0 0.0
          %1176 = vmatpush1.msra.mxu0 0.0
          %1177 = vmatprep.subr.mxu0 0.0
          %1178 = vmatpush1.msra.mxu0 0.0
          %1179 = vmatprep.subr.mxu0 0.0
          %1180 = vmatpush1.msra.mxu0 0.0
          %1181 = vmatprep.subr.mxu0 0.0
          %1182 = vmatpush1.msra.mxu0 0.0
          %1183 = vmatprep.subr.mxu0 0.0
          %1184 = vmatpush1.msra.mxu0 0.0
          %1185 = vmatprep.subr.mxu0 0.0
          %1186 = vmatpush1.msra.mxu0 0.0
          %1187 = vmatprep.subr.mxu0 0.0
          %1188 = vmatpush1.msra.mxu0 0.0
          %1189 = vmatprep.mubr.f32.mxu0 0.0
          %1190 = vmatmul.mubr.f32.gmra.mrb[0].mxu0 %v1123
          %v1191 = vpop.f32.mrb[0].mxu0
          %v1192 = vadd.f32 0.0, %v1191
          %v1193 = vpop.f32.mrb[0].mxu0
          %1194 = vdwg.mxu0
          %1195 = vmatprep.subr.mxu0 0.0
          %1196 = vmatpush1.msra.mxu0 %v734
          %1197 = vmatprep.subr.mxu0 0.0
          %1198 = vmatpush1.msra.mxu0 %v738
          %1199 = vmatprep.subr.mxu0 0.0
          %1200 = vmatpush1.msra.mxu0 %v744
          %1201 = vmatprep.subr.mxu0 0.0
          %1202 = vmatpush1.msra.mxu0 %v748
          %1203 = vmatprep.subr.mxu0 0.0
          %1204 = vmatpush1.msra.mxu0 %v754
          %1205 = vmatprep.subr.mxu0 0.0
          %1206 = vmatpush1.msra.mxu0 %v758
          %1207 = vmatprep.subr.mxu0 0.0
          %1208 = vmatpush1.msra.mxu0 %v764
          %1209 = vmatprep.subr.mxu0 0.0
          %1210 = vmatpush1.msra.mxu0 %v768
          %1211 = vmatprep.subr.mxu0 0.0
          %1212 = vmatpush1.msra.mxu0 %v774
          %1213 = vmatprep.subr.mxu0 0.0
          %1214 = vmatpush1.msra.mxu0 %v778
          %1215 = vmatprep.subr.mxu0 0.0
          %1216 = vmatpush1.msra.mxu0 %v784
          %1217 = vmatprep.subr.mxu0 0.0
          %1218 = vmatpush1.msra.mxu0 %v788
          %1219 = vmatprep.subr.mxu0 0.0
          %1220 = vmatpush1.msra.mxu0 %v794
          %1221 = vmatprep.subr.mxu0 0.0
          %1222 = vmatpush1.msra.mxu0 %v798
          %1223 = vmatprep.subr.mxu0 0.0
          %1224 = vmatpush1.msra.mxu0 %v804
          %1225 = vmatprep.subr.mxu0 0.0
          %1226 = vmatpush1.msra.mxu0 %v808
          %1227 = vmatprep.subr.mxu0 0.0
          %1228 = vmatpush1.msra.mxu0 0.0
          %1229 = vmatprep.subr.mxu0 0.0
          %1230 = vmatpush1.msra.mxu0 0.0
          %1231 = vmatprep.subr.mxu0 0.0
          %1232 = vmatpush1.msra.mxu0 0.0
          %1233 = vmatprep.subr.mxu0 0.0
          %1234 = vmatpush1.msra.mxu0 0.0
          %1235 = vmatprep.subr.mxu0 0.0
          %1236 = vmatpush1.msra.mxu0 0.0
          %1237 = vmatprep.subr.mxu0 0.0
          %1238 = vmatpush1.msra.mxu0 0.0
          %1239 = vmatprep.subr.mxu0 0.0
          %1240 = vmatpush1.msra.mxu0 0.0
          %1241 = vmatprep.subr.mxu0 0.0
          %1242 = vmatpush1.msra.mxu0 0.0
          %1243 = vmatprep.subr.mxu0 0.0
          %1244 = vmatpush1.msra.mxu0 0.0
          %1245 = vmatprep.subr.mxu0 0.0
          %1246 = vmatpush1.msra.mxu0 0.0
          %1247 = vmatprep.subr.mxu0 0.0
          %1248 = vmatpush1.msra.mxu0 0.0
          %1249 = vmatprep.subr.mxu0 0.0
          %1250 = vmatpush1.msra.mxu0 0.0
          %1251 = vmatprep.subr.mxu0 0.0
          %1252 = vmatpush1.msra.mxu0 0.0
          %1253 = vmatprep.subr.mxu0 0.0
          %1254 = vmatpush1.msra.mxu0 0.0
          %1255 = vmatprep.subr.mxu0 0.0
          %1256 = vmatpush1.msra.mxu0 0.0
          %1257 = vmatprep.subr.mxu0 0.0
          %1258 = vmatpush1.msra.mxu0 0.0
          %1259 = vmatprep.mubr.f32.mxu0 0.0
          %1260 = vmatmul.mubr.f32.gmra.mrb[0].mxu0 %v1124
          %v1261 = vpop.f32.mrb[0].mxu0
          %v1262 = vadd.f32 0.0, %v1261
          %v1263 = vpop.f32.mrb[0].mxu0
          %1264 = vdwg.mxu0
          %v1265 = vpack.c.bf16 %v1192, %v1192
          %v1266 = vpack.c.bf16 %v1262, %v1262
          %s1267 = scalar_lea.vmem [#allocation9], 576
          %v1268 = vld [vmem:[%s1267] sm:$0xf]
          %v1269 = vld [vmem:[%s1267 + $0x4] sm:$0xf]
          %v1270 = vld [vmem:[%s1267 + $0x8] sm:$0xf]
          %v1271 = vld [vmem:[%s1267 + $0xc] sm:$0xf]
          %v1272 = vld [vmem:[%s1267 + $0x10] sm:$0xf]
          %v1273 = vld [vmem:[%s1267 + $0x14] sm:$0xf]
          %v1274 = vld [vmem:[%s1267 + $0x18] sm:$0xf]
          %v1275 = vld [vmem:[%s1267 + $0x1c] sm:$0xf]
          %v1276 = vld [vmem:[%s1267 + $0x20] sm:$0xf]
          %v1277 = vld [vmem:[%s1267 + $0x24] sm:$0xf]
          %v1278 = vld [vmem:[%s1267 + $0x28] sm:$0xf]
          %v1279 = vld [vmem:[%s1267 + $0x2c] sm:$0xf]
          %v1280 = vld [vmem:[%s1267 + $0x30] sm:$0xf]
          %v1281 = vld [vmem:[%s1267 + $0x34] sm:$0xf]
          %v1282 = vld [vmem:[%s1267 + $0x38] sm:$0xf]
          %v1283 = vld [vmem:[%s1267 + $0x3c] sm:$0xf]
          %v1284 = vld [vmem:[%s6 + $0x9] sm:$0x1]
          %v1285 = vlaneseq
          %v1286 = vshrl.u32 %v1285, 7
          %v1287 = vsub.s32 0, %v1286
          %v1288 = vrot.slane %v1284, %v1287
          %v1291 = vunpack.c.l.b16 %v1265
          %v1292 = vunpack.c.l.b16 %v1266
          %v1293 = vrot.slane %v1292, 7
          %v1294 = vsel %vm839, %v1293, %v1291
          %v1295 = vpack.c.b16 %v1294, %v1294
          %v1313 = vunpack.c.l.b16 %v1268
          %v1314 = vunpack.c.l.b16 %v1269
          %v1315 = vunpack.c.l.b16 %v1270
          %v1316 = vunpack.c.l.b16 %v1271
          %v1317 = vunpack.c.l.b16 %v1272
          %v1318 = vunpack.c.l.b16 %v1273
          %v1319 = vunpack.c.l.b16 %v1274
          %v1320 = vunpack.c.l.b16 %v1275
          %v1321 = vunpack.c.l.b16 %v1276
          %v1322 = vunpack.c.l.b16 %v1277
          %v1323 = vunpack.c.l.b16 %v1278
          %v1324 = vunpack.c.l.b16 %v1279
          %v1325 = vunpack.c.l.b16 %v1280
          %v1326 = vunpack.c.l.b16 %v1281
          %v1327 = vunpack.c.l.b16 %v1282
          %v1328 = vunpack.c.l.b16 %v1283
          %v1329 = vpack.c.b16 %v1314, %v1313
          %v1330 = vpack.c.b16 %v1316, %v1315
          %v1331 = vpack.c.b16 %v1318, %v1317
          %v1332 = vpack.c.b16 %v1320, %v1319
          %v1333 = vpack.c.b16 %v1322, %v1321
          %v1334 = vpack.c.b16 %v1324, %v1323
          %v1335 = vpack.c.b16 %v1326, %v1325
          %v1336 = vpack.c.b16 %v1328, %v1327
          %1345 = vmatprep.subr.bf16.mxu0 0
          %1346 = vmatpush1.bf16.msra.mxu0 %v1329
          %1347 = vmatprep.subr.bf16.mxu0 0
          %1348 = vmatpush1.bf16.msra.mxu0 %v1330
          %1349 = vmatprep.subr.bf16.mxu0 0
          %1350 = vmatpush1.bf16.msra.mxu0 %v1331
          %1351 = vmatprep.subr.bf16.mxu0 0
          %1352 = vmatpush1.bf16.msra.mxu0 %v1332
          %1353 = vmatprep.subr.bf16.mxu0 0
          %1354 = vmatpush1.bf16.msra.mxu0 %v1333
          %1355 = vmatprep.subr.bf16.mxu0 0
          %1356 = vmatpush1.bf16.msra.mxu0 %v1334
          %1357 = vmatprep.subr.bf16.mxu0 0
          %1358 = vmatpush1.bf16.msra.mxu0 %v1335
          %1359 = vmatprep.subr.bf16.mxu0 0
          %1360 = vmatpush1.bf16.msra.mxu0 %v1336
          %1361 = vmatprep.subr.bf16.mxu0 0
          %1362 = vmatpush1.bf16.msra.mxu0 0
          %1363 = vmatprep.subr.bf16.mxu0 0
          %1364 = vmatpush1.bf16.msra.mxu0 0
          %1365 = vmatprep.subr.bf16.mxu0 0
          %1366 = vmatpush1.bf16.msra.mxu0 0
          %1367 = vmatprep.subr.bf16.mxu0 0
          %1368 = vmatpush1.bf16.msra.mxu0 0
          %1369 = vmatprep.subr.bf16.mxu0 0
          %1370 = vmatpush1.bf16.msra.mxu0 0
          %1371 = vmatprep.subr.bf16.mxu0 0
          %1372 = vmatpush1.bf16.msra.mxu0 0
          %1373 = vmatprep.subr.bf16.mxu0 0
          %1374 = vmatpush1.bf16.msra.mxu0 0
          %1375 = vmatprep.subr.bf16.mxu0 0
          %1376 = vmatpush1.bf16.msra.mxu0 0
          %1377 = vmatprep.mubr.bf16.mxu0 0
          %1378 = vmatmul.mubr.bf16.gmra.mrb[0].mxu0 %v1295
          %v1379 = vpop.f32.mrb[0].mxu0
          %v1380 = vadd.f32 %v1288, %v1379
          %v1381 = vpop.f32.mrb[0].mxu0
          %v1382 = vpop.f32.mrb[0].mxu0
          %v1383 = vpop.f32.mrb[0].mxu0
          %1384 = vdwg.mxu0
          %v1386 = vrot.slane %v1380, 1
          %v1389 = vadd.f32 %v461, %v1380
          %v1390 = vadd.f32 %v477, %v1386
          %v1393 = vrot.slane %v1390, 7
          %v1394 = vsel %vm839, %v1393, %v1389
          %vm1396 = vcmask 1041408
          %v1397 = vsel %vm1396, %v1394, 0.0
          %1398 = vadd.xlane.f32.xlu0 %v1397
          %v1399 = vpop.xlane.xlu0 %1398
          %v1400 = vmul.f32 %v1399, 0.03125
          %v1401 = vmul.f32 %v1389, %v1389
          %v1402 = vmul.f32 %v1390, %v1390
          %v1405 = vrot.slane %v1402, 7
          %v1406 = vsel %vm839, %v1405, %v1401
          %v1408 = vsel %vm1396, %v1406, 0.0
          %1409 = vadd.xlane.f32.xlu0 %v1408
          %v1410 = vpop.xlane.xlu0 %1409
          %v1411 = vmul.f32 %v1410, 0.03125
          %v1412 = vmul.f32 %v1400, %v1400
          %v1413 = vsub.f32 %v1411, %v1412
          %v1415 = vrot.slane %v1400, 1
          %v1418 = vsub.f32 %v1389, %v1400
          %v1419 = vsub.f32 %v1390, %v1415
          %v1420 = vadd.f32 %v1413, 1e-05
          %v1421 = vrsqrt.pop %v1420
          %v1423 = vrot.slane %v1421, 1
          %v1426 = vmul.f32 %v1418, %v1421
          %v1427 = vmul.f32 %v1419, %v1423
          %v1428 = vld [vmem:[%s6 + $0xa] sm:$0x1]
          %v1429 = vlaneseq
          %v1430 = vshrl.u32 %v1429, 7
          %v1431 = vsub.s32 0, %v1430
          %v1432 = vrot.slane %v1428, %v1431
          %v1433 = vmul.f32 %v1426, %v1432
          %v1434 = vmul.f32 %v1427, %v1432
          %v1435 = vld [vmem:[%s6 + $0xb] sm:$0x1]
          %v1436 = vlaneseq
          %v1437 = vshrl.u32 %v1436, 7
          %v1438 = vsub.s32 0, %v1437
          %v1439 = vrot.slane %v1435, %v1438
          %v1440 = vadd.f32 %v1433, %v1439
          %v1441 = vadd.f32 %v1434, %v1439
          %v1442 = vpack.c.bf16 %v1440, %v1440
          %v1443 = vpack.c.bf16 %v1441, %v1441
          %s1444 = scalar_lea.vmem [#allocation9], 640
          %v1445 = vld [vmem:[%s1444] sm:$0xf]
          %v1446 = vld [vmem:[%s1444 + $0x4] sm:$0xf]
          %v1447 = vld [vmem:[%s1444 + $0x8] sm:$0xf]
          %v1448 = vld [vmem:[%s1444 + $0xc] sm:$0xf]
          %v1449 = vld [vmem:[%s1444 + $0x10] sm:$0xf]
          %v1450 = vld [vmem:[%s1444 + $0x14] sm:$0xf]
          %v1451 = vld [vmem:[%s1444 + $0x18] sm:$0xf]
          %v1452 = vld [vmem:[%s1444 + $0x1c] sm:$0xf]
          %v1453 = vld [vmem:[%s1444 + $0x20] sm:$0xf]
          %v1454 = vld [vmem:[%s1444 + $0x24] sm:$0xf]
          %v1455 = vld [vmem:[%s1444 + $0x28] sm:$0xf]
          %v1456 = vld [vmem:[%s1444 + $0x2c] sm:$0xf]
          %v1457 = vld [vmem:[%s1444 + $0x30] sm:$0xf]
          %v1458 = vld [vmem:[%s1444 + $0x34] sm:$0xf]
          %v1459 = vld [vmem:[%s1444 + $0x38] sm:$0xf]
          %v1460 = vld [vmem:[%s1444 + $0x3c] sm:$0xf]
          %v1461 = vld [vmem:[%s6 + $0xc] sm:$0x1]
          %v1462 = vlaneseq
          %v1463 = vshrl.u32 %v1462, 7
          %v1464 = vsub.s32 0, %v1463
          %v1465 = vrot.slane %v1461, %v1464
          %v1468 = vunpack.c.l.b16 %v1442
          %v1469 = vunpack.c.l.b16 %v1443
          %v1470 = vrot.slane %v1469, 7
          %v1471 = vsel %vm839, %v1470, %v1468
          %v1472 = vpack.c.b16 %v1471, %v1471
          %v1490 = vunpack.c.l.b16 %v1445
          %v1491 = vunpack.c.l.b16 %v1446
          %v1492 = vunpack.c.l.b16 %v1447
          %v1493 = vunpack.c.l.b16 %v1448
          %v1494 = vunpack.c.l.b16 %v1449
          %v1495 = vunpack.c.l.b16 %v1450
          %v1496 = vunpack.c.l.b16 %v1451
          %v1497 = vunpack.c.l.b16 %v1452
          %v1498 = vunpack.c.l.b16 %v1453
          %v1499 = vunpack.c.l.b16 %v1454
          %v1500 = vunpack.c.l.b16 %v1455
          %v1501 = vunpack.c.l.b16 %v1456
          %v1502 = vunpack.c.l.b16 %v1457
          %v1503 = vunpack.c.l.b16 %v1458
          %v1504 = vunpack.c.l.b16 %v1459
          %v1505 = vunpack.c.l.b16 %v1460
          %v1506 = vpack.c.b16 %v1491, %v1490
          %v1507 = vpack.c.b16 %v1493, %v1492
          %v1508 = vpack.c.b16 %v1495, %v1494
          %v1509 = vpack.c.b16 %v1497, %v1496
          %v1510 = vpack.c.b16 %v1499, %v1498
          %v1511 = vpack.c.b16 %v1501, %v1500
          %v1512 = vpack.c.b16 %v1503, %v1502
          %v1513 = vpack.c.b16 %v1505, %v1504
          %1522 = vmatprep.subr.bf16.mxu0 0
          %1523 = vmatpush1.bf16.msra.mxu0 %v1506
          %1524 = vmatprep.subr.bf16.mxu0 0
          %1525 = vmatpush1.bf16.msra.mxu0 %v1507
          %1526 = vmatprep.subr.bf16.mxu0 0
          %1527 = vmatpush1.bf16.msra.mxu0 %v1508
          %1528 = vmatprep.subr.bf16.mxu0 0
          %1529 = vmatpush1.bf16.msra.mxu0 %v1509
          %1530 = vmatprep.subr.bf16.mxu0 0
          %1531 = vmatpush1.bf16.msra.mxu0 %v1510
          %1532 = vmatprep.subr.bf16.mxu0 0
          %1533 = vmatpush1.bf16.msra.mxu0 %v1511
          %1534 = vmatprep.subr.bf16.mxu0 0
          %1535 = vmatpush1.bf16.msra.mxu0 %v1512
          %1536 = vmatprep.subr.bf16.mxu0 0
          %1537 = vmatpush1.bf16.msra.mxu0 %v1513
          %1538 = vmatprep.subr.bf16.mxu0 0
          %1539 = vmatpush1.bf16.msra.mxu0 0
          %1540 = vmatprep.subr.bf16.mxu0 0
          %1541 = vmatpush1.bf16.msra.mxu0 0
          %1542 = vmatprep.subr.bf16.mxu0 0
          %1543 = vmatpush1.bf16.msra.mxu0 0
          %1544 = vmatprep.subr.bf16.mxu0 0
          %1545 = vmatpush1.bf16.msra.mxu0 0
          %1546 = vmatprep.subr.bf16.mxu0 0
          %1547 = vmatpush1.bf16.msra.mxu0 0
          %1548 = vmatprep.subr.bf16.mxu0 0
          %1549 = vmatpush1.bf16.msra.mxu0 0
          %1550 = vmatprep.subr.bf16.mxu0 0
          %1551 = vmatpush1.bf16.msra.mxu0 0
          %1552 = vmatprep.subr.bf16.mxu0 0
          %1553 = vmatpush1.bf16.msra.mxu0 0
          %1554 = vmatprep.mubr.bf16.mxu0 0
          %1555 = vmatmul.mubr.bf16.gmra.mrb[0].mxu0 %v1472
          %v1556 = vpop.f32.mrb[0].mxu0
          %v1557 = vadd.f32 %v1465, %v1556
          %v1558 = vpop.f32.mrb[0].mxu0
          %v1559 = vpop.f32.mrb[0].mxu0
          %v1560 = vpop.f32.mrb[0].mxu0
          %1561 = vdwg.mxu0
          %v1562 = vmul.f32 %v1557, 0.5
          %v1563 = vmul.f32 %v1557, 0.044715
          %v1564 = vmul.f32 %v1563, %v1557
          %v1565 = vmul.f32 %v1564, %v1557
          %v1566 = vadd.f32 %v1557, %v1565
          %v1567 = vmul.f32 %v1566, 0.7978846
          %v1568 = vtanh.pop %v1567
          %v1569 = vadd.f32 %v1568, 1.0
          %v1570 = vmul.f32 %v1562, %v1569
          %v1571 = vpack.c.bf16 %v1570, %v1570
          %s1572 = scalar_lea.vmem [#allocation9], 704
          %v1573 = vld [vmem:[%s1572] sm:$0xf]
          %v1574 = vld [vmem:[%s1572 + $0x4] sm:$0xf]
          %v1575 = vld [vmem:[%s1572 + $0x8] sm:$0xf]
          %v1576 = vld [vmem:[%s1572 + $0xc] sm:$0xf]
          %v1577 = vld [vmem:[%s1572 + $0x10] sm:$0xf]
          %v1578 = vld [vmem:[%s1572 + $0x14] sm:$0xf]
          %v1579 = vld [vmem:[%s1572 + $0x18] sm:$0xf]
          %v1580 = vld [vmem:[%s1572 + $0x1c] sm:$0xf]
          %v1581 = vld [vmem:[%s1572 + $0x20] sm:$0xf]
          %v1582 = vld [vmem:[%s1572 + $0x24] sm:$0xf]
          %v1583 = vld [vmem:[%s1572 + $0x28] sm:$0xf]
          %v1584 = vld [vmem:[%s1572 + $0x2c] sm:$0xf]
          %v1585 = vld [vmem:[%s1572 + $0x30] sm:$0xf]
          %v1586 = vld [vmem:[%s1572 + $0x34] sm:$0xf]
          %v1587 = vld [vmem:[%s1572 + $0x38] sm:$0xf]
          %v1588 = vld [vmem:[%s1572 + $0x3c] sm:$0xf]
          %v1589 = vld [vmem:[%s6 + $0xd] sm:$0x1]
          %v1590 = vlaneseq
          %v1591 = vshrl.u32 %v1590, 7
          %v1592 = vsub.s32 0, %v1591
          %v1593 = vrot.slane %v1589, %v1592
          %v1610 = vunpack.c.l.b16 %v1573
          %v1611 = vunpack.c.l.b16 %v1574
          %v1612 = vunpack.c.l.b16 %v1575
          %v1613 = vunpack.c.l.b16 %v1576
          %v1614 = vunpack.c.l.b16 %v1577
          %v1615 = vunpack.c.l.b16 %v1578
          %v1616 = vunpack.c.l.b16 %v1579
          %v1617 = vunpack.c.l.b16 %v1580
          %v1618 = vunpack.c.l.b16 %v1581
          %v1619 = vunpack.c.l.b16 %v1582
          %v1620 = vunpack.c.l.b16 %v1583
          %v1621 = vunpack.c.l.b16 %v1584
          %v1622 = vunpack.c.l.b16 %v1585
          %v1623 = vunpack.c.l.b16 %v1586
          %v1624 = vunpack.c.l.b16 %v1587
          %v1625 = vunpack.c.l.b16 %v1588
          %v1626 = vpack.c.b16 %v1611, %v1610
          %v1627 = vpack.c.b16 %v1613, %v1612
          %v1628 = vpack.c.b16 %v1615, %v1614
          %v1629 = vpack.c.b16 %v1617, %v1616
          %v1630 = vpack.c.b16 %v1619, %v1618
          %v1631 = vpack.c.b16 %v1621, %v1620
          %v1632 = vpack.c.b16 %v1623, %v1622
          %v1633 = vpack.c.b16 %v1625, %v1624
          %1642 = vmatprep.subr.bf16.mxu0 0
          %1643 = vmatpush1.bf16.msra.mxu0 %v1626
          %1644 = vmatprep.subr.bf16.mxu0 0
          %1645 = vmatpush1.bf16.msra.mxu0 %v1627
          %1646 = vmatprep.subr.bf16.mxu0 0
          %1647 = vmatpush1.bf16.msra.mxu0 %v1628
          %1648 = vmatprep.subr.bf16.mxu0 0
          %1649 = vmatpush1.bf16.msra.mxu0 %v1629
          %1650 = vmatprep.subr.bf16.mxu0 0
          %1651 = vmatpush1.bf16.msra.mxu0 %v1630
          %1652 = vmatprep.subr.bf16.mxu0 0
          %1653 = vmatpush1.bf16.msra.mxu0 %v1631
          %1654 = vmatprep.subr.bf16.mxu0 0
          %1655 = vmatpush1.bf16.msra.mxu0 %v1632
          %1656 = vmatprep.subr.bf16.mxu0 0
          %1657 = vmatpush1.bf16.msra.mxu0 %v1633
          %1658 = vmatprep.subr.bf16.mxu0 0
          %1659 = vmatpush1.bf16.msra.mxu0 0
          %1660 = vmatprep.subr.bf16.mxu0 0
          %1661 = vmatpush1.bf16.msra.mxu0 0
          %1662 = vmatprep.subr.bf16.mxu0 0
          %1663 = vmatpush1.bf16.msra.mxu0 0
          %1664 = vmatprep.subr.bf16.mxu0 0
          %1665 = vmatpush1.bf16.msra.mxu0 0
          %1666 = vmatprep.subr.bf16.mxu0 0
          %1667 = vmatpush1.bf16.msra.mxu0 0
          %1668 = vmatprep.subr.bf16.mxu0 0
          %1669 = vmatpush1.bf16.msra.mxu0 0
          %1670 = vmatprep.subr.bf16.mxu0 0
          %1671 = vmatpush1.bf16.msra.mxu0 0
          %1672 = vmatprep.subr.bf16.mxu0 0
          %1673 = vmatpush1.bf16.msra.mxu0 0
          %1674 = vmatprep.mubr.bf16.mxu0 0
          %1675 = vmatmul.mubr.bf16.gmra.mrb[0].mxu0 %v1571
          %v1676 = vpop.f32.mrb[0].mxu0
          %v1677 = vadd.f32 %v1593, %v1676
          %v1678 = vpop.f32.mrb[0].mxu0
          %v1679 = vpop.f32.mrb[0].mxu0
          %v1680 = vpop.f32.mrb[0].mxu0
          %1681 = vdwg.mxu0
          %v1683 = vrot.slane %v1677, 1
          %v1686 = vadd.f32 %v1440, %v1677
          %v1687 = vadd.f32 %v1441, %v1683
          %v1690 = vrot.slane %v1687, 7
          %v1691 = vsel %vm839, %v1690, %v1686
          %v1693 = vsel %vm1396, %v1691, 0.0
          %1694 = vadd.xlane.f32.xlu0 %v1693
          %v1695 = vpop.xlane.xlu0 %1694
          %v1696 = vmul.f32 %v1695, 0.03125
          %v1697 = vmul.f32 %v1686, %v1686
          %v1698 = vmul.f32 %v1687, %v1687
          %v1701 = vrot.slane %v1698, 7
          %v1702 = vsel %vm839, %v1701, %v1697
          %v1704 = vsel %vm1396, %v1702, 0.0
          %1705 = vadd.xlane.f32.xlu0 %v1704
          %v1706 = vpop.xlane.xlu0 %1705
          %v1707 = vmul.f32 %v1706, 0.03125
          %v1708 = vmul.f32 %v1696, %v1696
          %v1709 = vsub.f32 %v1707, %v1708
          %v1711 = vrot.slane %v1696, 1
          %v1714 = vsub.f32 %v1686, %v1696
          %v1715 = vsub.f32 %v1687, %v1711
          %v1716 = vadd.f32 %v1709, 1e-05
          %v1717 = vrsqrt.pop %v1716
          %v1719 = vrot.slane %v1717, 1
          %v1722 = vmul.f32 %v1714, %v1717
          %v1723 = vmul.f32 %v1715, %v1719
          %v1724 = vld [vmem:[%s6 + $0xe] sm:$0x1]
          %v1725 = vlaneseq
          %v1726 = vshrl.u32 %v1725, 7
          %v1727 = vsub.s32 0, %v1726
          %v1728 = vrot.slane %v1724, %v1727
          %v1729 = vmul.f32 %v1722, %v1728
          %v1730 = vmul.f32 %v1723, %v1728
          %v1731 = vld [vmem:[%s6 + $0xf] sm:$0x1]
          %v1732 = vlaneseq
          %v1733 = vshrl.u32 %v1732, 7
          %v1734 = vsub.s32 0, %v1733
          %v1735 = vrot.slane %v1731, %v1734
          %v1736 = vadd.f32 %v1729, %v1735
          %v1737 = vadd.f32 %v1730, %v1735
          %v1740 = vrot.slane %v1737, 7
          %v1741 = vsel %vm839, %v1740, %v1736
          %1743 = vst [vmem:[#allocation13] sm:$0x3] %v1741
        $region80: #{tpu_custom_call.1} parent=55 // pred_fallthru
          _
        %p1744 = scmp.lt.s32.totalorder %s33, 0
        %s1745 = ssub.s32 0, %s33
        %s1746 = scalar_select %p1744, %s1745, %s33
        %s1747 = sand.u32 %s1746, 1
        %s1748 = ssub.s32 0, %s1747
        %s1749 = scalar_select %p1744, %s1748, %s1747
        %p1750 = scmp.ne.s32.totalorder %s1749, 0
        %p1751 = scmp.lt.s32.totalorder %s1749, 0
        %p1752 = pnand %p1751, %p1750
        %p1753 = pneg %p1752
        %s1754 = sadd.s32 %s1749, 2
        %s1755 = scalar_select %p1753, %s1754, %s1749
        %s1756 = ssub.s32 1, %s1755
        %v1757 = vld [vmem:[%s387] sm:$0xf]
        %v1758 = vld [vmem:[%s387 + $0x4] sm:$0xf]
        %s1759 = smul.u32 %s1755, 2
        %s1760 = smul.addr %s1759, 8
        %s1761 = scalar_lea.vmem [#allocation2], %s1760
        %v1762 = vld [vmem:[%s1761] sm:$0xff]
        %v1763 = vld [vmem:[%s1761 + $0x8] sm:$0xff]
        %v1766 = vunpack.c.l.b16 %v1757
        %v1767 = vunpack.c.l.b16 %v1758
        %v1768 = vpack.c.b16 %v1767, %v1766
        %vm1769 = vcmask 261120
        %v1771 = vsel %vm1769, %v1768, 0
        %1773 = vmatprep.subr.bf16.mxu0 0
        %1774 = vmatpush1.bf16.msra.mxu0 %v1762
        %1775 = vmatprep.subr.bf16.mxu0 0
        %1776 = vmatpush1.bf16.msra.mxu0 %v1763
        %1777 = vmatprep.subr.bf16.mxu0 0
        %1778 = vmatpush1.bf16.msra.mxu0 0
        %1779 = vmatprep.subr.bf16.mxu0 0
        %1780 = vmatpush1.bf16.msra.mxu0 0
        %1781 = vmatprep.subr.bf16.mxu0 0
        %1782 = vmatpush1.bf16.msra.mxu0 0
        %1783 = vmatprep.subr.bf16.mxu0 0
        %1784 = vmatpush1.bf16.msra.mxu0 0
        %1785 = vmatprep.subr.bf16.mxu0 0
        %1786 = vmatpush1.bf16.msra.mxu0 0
        %1787 = vmatprep.subr.bf16.mxu0 0
        %1788 = vmatpush1.bf16.msra.mxu0 0
        %1789 = vmatprep.subr.bf16.mxu0 0
        %1790 = vmatpush1.bf16.msra.mxu0 0
        %1791 = vmatprep.subr.bf16.mxu0 0
        %1792 = vmatpush1.bf16.msra.mxu0 0
        %1793 = vmatprep.subr.bf16.mxu0 0
        %1794 = vmatpush1.bf16.msra.mxu0 0
        %1795 = vmatprep.subr.bf16.mxu0 0
        %1796 = vmatpush1.bf16.msra.mxu0 0
        %1797 = vmatprep.subr.bf16.mxu0 0
        %1798 = vmatpush1.bf16.msra.mxu0 0
        %1799 = vmatprep.subr.bf16.mxu0 0
        %1800 = vmatpush1.bf16.msra.mxu0 0
        %1801 = vmatprep.subr.bf16.mxu0 0
        %1802 = vmatpush1.bf16.msra.mxu0 0
        %1803 = vmatprep.subr.bf16.mxu0 0
        %1804 = vmatpush1.bf16.msra.mxu0 0
        %1805 = vmatprep.mubr.bf16.mxu0 0
        %1806 = vmatmul.mubr.bf16.gmra.mrb[0].mxu0 %v1771
        %v1807 = vpop.f32.mrb[0].mxu0
        %v1808 = vadd.f32 0.0, %v1807
        %v1809 = vpop.f32.mrb[0].mxu0
        %v1810 = vpop.f32.mrb[0].mxu0
        %v1811 = vadd.f32 0.0, %v1810
        %v1812 = vpop.f32.mrb[0].mxu0
        %1813 = vdwg.mxu0
        %s1814 = smul.u32 %s33, 2
        %s1815 = smul.u32 %s1814, 16
        %s1816 = smul.addr %s1815, 4
        %s1817 = scalar_lea.vmem [#allocation9], %s1816
        %v1818 = vld [vmem:[%s1817] sm:$0xf]
        %v1819 = vld [vmem:[%s1817 + $0x4] sm:$0xf]
        %v1820 = vld [vmem:[%s1817 + $0x8] sm:$0xf]
        %v1821 = vld [vmem:[%s1817 + $0xc] sm:$0xf]
        %v1822 = vld [vmem:[%s1817 + $0x10] sm:$0xf]
        %v1823 = vld [vmem:[%s1817 + $0x14] sm:$0xf]
        %v1824 = vld [vmem:[%s1817 + $0x18] sm:$0xf]
        %v1825 = vld [vmem:[%s1817 + $0x1c] sm:$0xf]
        %v1826 = vld [vmem:[%s1817 + $0x20] sm:$0xf]
        %v1827 = vld [vmem:[%s1817 + $0x24] sm:$0xf]
        %v1828 = vld [vmem:[%s1817 + $0x28] sm:$0xf]
        %v1829 = vld [vmem:[%s1817 + $0x2c] sm:$0xf]
        %v1830 = vld [vmem:[%s1817 + $0x30] sm:$0xf]
        %v1831 = vld [vmem:[%s1817 + $0x34] sm:$0xf]
        %v1832 = vld [vmem:[%s1817 + $0x38] sm:$0xf]
        %v1833 = vld [vmem:[%s1817 + $0x3c] sm:$0xf]
        %s1834 = sadd.s32 %s1814, 1
        %s1835 = smul.u32 %s1834, 16
        %s1836 = smul.addr %s1835, 4
        %s1837 = scalar_lea.vmem [#allocation9], %s1836
        %v1838 = vld [vmem:[%s1837] sm:$0xf]
        %v1839 = vld [vmem:[%s1837 + $0x4] sm:$0xf]
        %v1840 = vld [vmem:[%s1837 + $0x8] sm:$0xf]
        %v1841 = vld [vmem:[%s1837 + $0xc] sm:$0xf]
        %v1842 = vld [vmem:[%s1837 + $0x10] sm:$0xf]
        %v1843 = vld [vmem:[%s1837 + $0x14] sm:$0xf]
        %v1844 = vld [vmem:[%s1837 + $0x18] sm:$0xf]
        %v1845 = vld [vmem:[%s1837 + $0x1c] sm:$0xf]
        %v1846 = vld [vmem:[%s1837 + $0x20] sm:$0xf]
        %v1847 = vld [vmem:[%s1837 + $0x24] sm:$0xf]
        %v1848 = vld [vmem:[%s1837 + $0x28] sm:$0xf]
        %v1849 = vld [vmem:[%s1837 + $0x2c] sm:$0xf]
        %v1850 = vld [vmem:[%s1837 + $0x30] sm:$0xf]
        %v1851 = vld [vmem:[%s1837 + $0x34] sm:$0xf]
        %v1852 = vld [vmem:[%s1837 + $0x38] sm:$0xf]
        %v1853 = vld [vmem:[%s1837 + $0x3c] sm:$0xf]
        %s1854 = scalar_lea.vmem %s6, %s1814
        %v1855 = vld [vmem:[%s1854] sm:$0x1]
        %s1856 = scalar_lea.vmem %s6, %s1834
        %v1857 = vld [vmem:[%s1856] sm:$0x1]
        %v1858 = vpack.c.bf16 %v1811, %v1808
        %v1859 = vlaneseq
        %v1860 = vshrl.u32 %v1859, 7
        %v1861 = vsub.s32 0, %v1860
        %v1862 = vrot.slane %v1855, %v1861
        %v1879 = vunpack.c.l.b16 %v1818
        %v1880 = vunpack.c.l.b16 %v1819
        %v1881 = vunpack.c.l.b16 %v1820
        %v1882 = vunpack.c.l.b16 %v1821
        %v1883 = vunpack.c.l.b16 %v1822
        %v1884 = vunpack.c.l.b16 %v1823
        %v1885 = vunpack.c.l.b16 %v1824
        %v1886 = vunpack.c.l.b16 %v1825
        %v1887 = vunpack.c.l.b16 %v1826
        %v1888 = vunpack.c.l.b16 %v1827
        %v1889 = vunpack.c.l.b16 %v1828
        %v1890 = vunpack.c.l.b16 %v1829
        %v1891 = vunpack.c.l.b16 %v1830
        %v1892 = vunpack.c.l.b16 %v1831
        %v1893 = vunpack.c.l.b16 %v1832
        %v1894 = vunpack.c.l.b16 %v1833
        %v1895 = vpack.c.b16 %v1880, %v1879
        %v1896 = vpack.c.b16 %v1882, %v1881
        %v1897 = vpack.c.b16 %v1884, %v1883
        %v1898 = vpack.c.b16 %v1886, %v1885
        %v1899 = vpack.c.b16 %v1888, %v1887
        %v1900 = vpack.c.b16 %v1890, %v1889
        %v1901 = vpack.c.b16 %v1892, %v1891
        %v1902 = vpack.c.b16 %v1894, %v1893
        %1911 = vmatprep.subr.bf16.mxu0 0
        %1912 = vmatpush1.bf16.msra.mxu0 %v1895
        %1913 = vmatprep.subr.bf16.mxu0 0
        %1914 = vmatpush1.bf16.msra.mxu0 %v1896
        %1915 = vmatprep.subr.bf16.mxu0 0
        %1916 = vmatpush1.bf16.msra.mxu0 %v1897
        %1917 = vmatprep.subr.bf16.mxu0 0
        %1918 = vmatpush1.bf16.msra.mxu0 %v1898
        %1919 = vmatprep.subr.bf16.mxu0 0
        %1920 = vmatpush1.bf16.msra.mxu0 %v1899
        %1921 = vmatprep.subr.bf16.mxu0 0
        %1922 = vmatpush1.bf16.msra.mxu0 %v1900
        %1923 = vmatprep.subr.bf16.mxu0 0
        %1924 = vmatpush1.bf16.msra.mxu0 %v1901
        %1925 = vmatprep.subr.bf16.mxu0 0
        %1926 = vmatpush1.bf16.msra.mxu0 %v1902
        %1927 = vmatprep.subr.bf16.mxu0 0
        %1928 = vmatpush1.bf16.msra.mxu0 0
        %1929 = vmatprep.subr.bf16.mxu0 0
        %1930 = vmatpush1.bf16.msra.mxu0 0
        %1931 = vmatprep.subr.bf16.mxu0 0
        %1932 = vmatpush1.bf16.msra.mxu0 0
        %1933 = vmatprep.subr.bf16.mxu0 0
        %1934 = vmatpush1.bf16.msra.mxu0 0
        %1935 = vmatprep.subr.bf16.mxu0 0
        %1936 = vmatpush1.bf16.msra.mxu0 0
        %1937 = vmatprep.subr.bf16.mxu0 0
        %1938 = vmatpush1.bf16.msra.mxu0 0
        %1939 = vmatprep.subr.bf16.mxu0 0
        %1940 = vmatpush1.bf16.msra.mxu0 0
        %1941 = vmatprep.subr.bf16.mxu0 0
        %1942 = vmatpush1.bf16.msra.mxu0 0
        %1943 = vmatprep.mubr.bf16.mxu0 0
        %1944 = vmatmul.mubr.bf16.gmra.mrb[0].mxu0 %v1858
        %v1945 = vpop.f32.mrb[0].mxu0
        %v1946 = vadd.f32 %v1862, %v1945
        %v1947 = vpop.f32.mrb[0].mxu0
        %v1948 = vpop.f32.mrb[0].mxu0
        %v1949 = vadd.f32 %v1862, %v1948
        %v1950 = vpop.f32.mrb[0].mxu0
        %1951 = vdwg.mxu0
        %v1952 = vmax.f32 %v1946, 0.0
        %v1953 = vmax.f32 %v1949, 0.0
        %v1954 = vpack.c.bf16 %v1953, %v1952
        %v1955 = vlaneseq
        %v1956 = vshrl.u32 %v1955, 7
        %v1957 = vsub.s32 0, %v1956
        %v1958 = vrot.slane %v1857, %v1957
        %v1975 = vunpack.c.l.b16 %v1838
        %v1976 = vunpack.c.l.b16 %v1839
        %v1977 = vunpack.c.l.b16 %v1840
        %v1978 = vunpack.c.l.b16 %v1841
        %v1979 = vunpack.c.l.b16 %v1842
        %v1980 = vunpack.c.l.b16 %v1843
        %v1981 = vunpack.c.l.b16 %v1844
        %v1982 = vunpack.c.l.b16 %v1845
        %v1983 = vunpack.c.l.b16 %v1846
        %v1984 = vunpack.c.l.b16 %v1847
        %v1985 = vunpack.c.l.b16 %v1848
        %v1986 = vunpack.c.l.b16 %v1849
        %v1987 = vunpack.c.l.b16 %v1850
        %v1988 = vunpack.c.l.b16 %v1851
        %v1989 = vunpack.c.l.b16 %v1852
        %v1990 = vunpack.c.l.b16 %v1853
        %v1991 = vpack.c.b16 %v1976, %v1975
        %v1992 = vpack.c.b16 %v1978, %v1977
        %v1993 = vpack.c.b16 %v1980, %v1979
        %v1994 = vpack.c.b16 %v1982, %v1981
        %v1995 = vpack.c.b16 %v1984, %v1983
        %v1996 = vpack.c.b16 %v1986, %v1985
        %v1997 = vpack.c.b16 %v1988, %v1987
        %v1998 = vpack.c.b16 %v1990, %v1989
        %2007 = vmatprep.subr.bf16.mxu0 0
        %2008 = vmatpush1.bf16.msra.mxu0 %v1991
        %2009 = vmatprep.subr.bf16.mxu0 0
        %2010 = vmatpush1.bf16.msra.mxu0 %v1992
        %2011 = vmatprep.subr.bf16.mxu0 0
        %2012 = vmatpush1.bf16.msra.mxu0 %v1993
        %2013 = vmatprep.subr.bf16.mxu0 0
        %2014 = vmatpush1.bf16.msra.mxu0 %v1994
        %2015 = vmatprep.subr.bf16.mxu0 0
        %2016 = vmatpush1.bf16.msra.mxu0 %v1995
        %2017 = vmatprep.subr.bf16.mxu0 0
        %2018 = vmatpush1.bf16.msra.mxu0 %v1996
        %2019 = vmatprep.subr.bf16.mxu0 0
        %2020 = vmatpush1.bf16.msra.mxu0 %v1997
        %2021 = vmatprep.subr.bf16.mxu0 0
        %2022 = vmatpush1.bf16.msra.mxu0 %v1998
        %2023 = vmatprep.subr.bf16.mxu0 0
        %2024 = vmatpush1.bf16.msra.mxu0 0
        %2025 = vmatprep.subr.bf16.mxu0 0
        %2026 = vmatpush1.bf16.msra.mxu0 0
        %2027 = vmatprep.subr.bf16.mxu0 0
        %2028 = vmatpush1.bf16.msra.mxu0 0
        %2029 = vmatprep.subr.bf16.mxu0 0
        %2030 = vmatpush1.bf16.msra.mxu0 0
        %2031 = vmatprep.subr.bf16.mxu0 0
        %2032 = vmatpush1.bf16.msra.mxu0 0
        %2033 = vmatprep.subr.bf16.mxu0 0
        %2034 = vmatpush1.bf16.msra.mxu0 0
        %2035 = vmatprep.subr.bf16.mxu0 0
        %2036 = vmatpush1.bf16.msra.mxu0 0
        %2037 = vmatprep.subr.bf16.mxu0 0
        %2038 = vmatpush1.bf16.msra.mxu0 0
        %2039 = vmatprep.mubr.bf16.mxu0 0
        %2040 = vmatmul.mubr.bf16.gmra.mrb[0].mxu0 %v1954
        %v2041 = vpop.f32.mrb[0].mxu0
        %v2042 = vadd.f32 %v1958, %v2041
        %v2043 = vpop.f32.mrb[0].mxu0
        %v2044 = vpop.f32.mrb[0].mxu0
        %v2045 = vadd.f32 %v1958, %v2044
        %v2046 = vpop.f32.mrb[0].mxu0
        %2047 = vdwg.mxu0
        %p2048 = scmp.gt.s32.totalorder %s33, 0
        %v2049 = vtanh.pop %v2042
        %v2050 = vtanh.pop %v2045
        %s2051 = scalar_select %p2048, 1, 0
        %v2052 = vstv %s2051
        %vm2053 = vcmp.eq.s32.totalorder %v2052, 1
        %v2054 = vsel %vm2053, %v2049, %v2042
        %v2055 = vsel %vm2053, %v2050, %v2045
        %p2056 = scmp.lt.s32.totalorder %s33, 2
        %v2057 = vmax.f32 %v2054, 0.0
        %v2058 = vmax.f32 %v2055, 0.0
        %s2059 = scalar_select %p2056, 1, 0
        %v2060 = vstv %s2059
        %vm2061 = vcmp.eq.s32.totalorder %v2060, 1
        %v2062 = vsel %vm2061, %v2057, %v2054
        %v2063 = vsel %vm2061, %v2058, %v2055
        %s2064 = smul.u32 %s34, 16
        %v2065 = vpack.c.bf16 %v2063, %v2062
        %s2066 = sshra.s32 %s2064, 4
        %s2067 = sand.u32 %s2064, 15
        %s2068 = smul.u32 %s1756, 2
        %s2069 = sadd.s32 %s2066, %s2068
        %s2070 = smul.addr %s2069, 8
        %s2071 = scalar_lea.vmem [#allocation2], %s2070
        %2072 = vst [vmem:[%s2071] sm:$0xff] %v2065
        %p2073 = scmp.eq.s32.totalorder %s33, 2
        %p2074 = scmp.eq.s32.totalorder %s34, 1
        %p2075 = pnand %p2073, %p2074
        %p2076 = pneg %p2075
        // Predicated region
        $region81: #{tpu_custom_call.1} parent=55 // pred_check
          _
        $region82: #{tpu_custom_call.1} parent=55 // pred_check_branch
          %2078 = sbr.rel (%p2075) target = $region84
        $region83: #{tpu_custom_call.1} parent=55 // pred_region
          %s2079 = smul.addr %s2068, 8
          %s2080 = scalar_lea.vmem [#allocation2], %s2079
          %v2081 = vld [vmem:[%s2080] sm:$0xff]
          %v2082 = vld [vmem:[%s2080 + $0x8] sm:$0xff]
          %v2083 = vld [vmem:[%s2] sm:$0x1]
          %v2085 = vsel %vm1769, %v2083, 0
          %2087 = vmatprep.subr.bf16.mxu0 0
          %2088 = vmatpush1.bf16.msra.mxu0 %v2081
          %2089 = vmatprep.subr.bf16.mxu0 0
          %2090 = vmatpush1.bf16.msra.mxu0 %v2082
          %2091 = vmatprep.subr.bf16.mxu0 0
          %2092 = vmatpush1.bf16.msra.mxu0 0
          %2093 = vmatprep.subr.bf16.mxu0 0
          %2094 = vmatpush1.bf16.msra.mxu0 0
          %2095 = vmatprep.subr.bf16.mxu0 0
          %2096 = vmatpush1.bf16.msra.mxu0 0
          %2097 = vmatprep.subr.bf16.mxu0 0
          %2098 = vmatpush1.bf16.msra.mxu0 0
          %2099 = vmatprep.subr.bf16.mxu0 0
          %2100 = vmatpush1.bf16.msra.mxu0 0
          %2101 = vmatprep.subr.bf16.mxu0 0
          %2102 = vmatpush1.bf16.msra.mxu0 0
          %2103 = vmatprep.subr.bf16.mxu0 0
          %2104 = vmatpush1.bf16.msra.mxu0 0
          %2105 = vmatprep.subr.bf16.mxu0 0
          %2106 = vmatpush1.bf16.msra.mxu0 0
          %2107 = vmatprep.subr.bf16.mxu0 0
          %2108 = vmatpush1.bf16.msra.mxu0 0
          %2109 = vmatprep.subr.bf16.mxu0 0
          %2110 = vmatpush1.bf16.msra.mxu0 0
          %2111 = vmatprep.subr.bf16.mxu0 0
          %2112 = vmatpush1.bf16.msra.mxu0 0
          %2113 = vmatprep.subr.bf16.mxu0 0
          %2114 = vmatpush1.bf16.msra.mxu0 0
          %2115 = vmatprep.subr.bf16.mxu0 0
          %2116 = vmatpush1.bf16.msra.mxu0 0
          %2117 = vmatprep.subr.bf16.mxu0 0
          %2118 = vmatpush1.bf16.msra.mxu0 0
          %2119 = vmatprep.mubr.bf16.mxu0 0
          %2120 = vmatmul.mubr.bf16.gmra.mrb[0].mxu0 %v2085
          %v2121 = vpop.f32.mrb[0].mxu0
          %v2122 = vadd.f32 0.0, %v2121
          %v2123 = vpop.f32.mrb[0].mxu0
          %v2124 = vpop.f32.mrb[0].mxu0
          %v2125 = vpop.f32.mrb[0].mxu0
          %2126 = vdwg.mxu0
          %v2127 = vpack.c.bf16 %v2122, %v2122
          %s2128 = scalar_lea.vmem [#allocation9], 384
          %v2129 = vld [vmem:[%s2128] sm:$0xf]
          %v2130 = vld [vmem:[%s2128 + $0x4] sm:$0xf]
          %v2131 = vld [vmem:[%s2128 + $0x8] sm:$0xf]
          %v2132 = vld [vmem:[%s2128 + $0xc] sm:$0xf]
          %v2133 = vld [vmem:[%s2128 + $0x10] sm:$0xf]
          %v2134 = vld [vmem:[%s2128 + $0x14] sm:$0xf]
          %v2135 = vld [vmem:[%s2128 + $0x18] sm:$0xf]
          %v2136 = vld [vmem:[%s2128 + $0x1c] sm:$0xf]
          %v2137 = vld [vmem:[%s2128 + $0x20] sm:$0xf]
          %v2138 = vld [vmem:[%s2128 + $0x24] sm:$0xf]
          %v2139 = vld [vmem:[%s2128 + $0x28] sm:$0xf]
          %v2140 = vld [vmem:[%s2128 + $0x2c] sm:$0xf]
          %v2141 = vld [vmem:[%s2128 + $0x30] sm:$0xf]
          %v2142 = vld [vmem:[%s2128 + $0x34] sm:$0xf]
          %v2143 = vld [vmem:[%s2128 + $0x38] sm:$0xf]
          %v2144 = vld [vmem:[%s2128 + $0x3c] sm:$0xf]
          %v2145 = vld [vmem:[%s6 + $0x6] sm:$0x1]
          %v2146 = vlaneseq
          %v2147 = vshrl.u32 %v2146, 7
          %v2148 = vsub.s32 0, %v2147
          %v2149 = vrot.slane %v2145, %v2148
          %v2166 = vunpack.c.l.b16 %v2129
          %v2167 = vunpack.c.l.b16 %v2130
          %v2168 = vunpack.c.l.b16 %v2131
          %v2169 = vunpack.c.l.b16 %v2132
          %v2170 = vunpack.c.l.b16 %v2133
          %v2171 = vunpack.c.l.b16 %v2134
          %v2172 = vunpack.c.l.b16 %v2135
          %v2173 = vunpack.c.l.b16 %v2136
          %v2174 = vunpack.c.l.b16 %v2137
          %v2175 = vunpack.c.l.b16 %v2138
          %v2176 = vunpack.c.l.b16 %v2139
          %v2177 = vunpack.c.l.b16 %v2140
          %v2178 = vunpack.c.l.b16 %v2141
          %v2179 = vunpack.c.l.b16 %v2142
          %v2180 = vunpack.c.l.b16 %v2143
          %v2181 = vunpack.c.l.b16 %v2144
          %v2182 = vpack.c.b16 %v2167, %v2166
          %v2183 = vpack.c.b16 %v2169, %v2168
          %v2184 = vpack.c.b16 %v2171, %v2170
          %v2185 = vpack.c.b16 %v2173, %v2172
          %v2186 = vpack.c.b16 %v2175, %v2174
          %v2187 = vpack.c.b16 %v2177, %v2176
          %v2188 = vpack.c.b16 %v2179, %v2178
          %v2189 = vpack.c.b16 %v2181, %v2180
          %2198 = vmatprep.subr.bf16.mxu0 0
          %2199 = vmatpush1.bf16.msra.mxu0 %v2182
          %2200 = vmatprep.subr.bf16.mxu0 0
          %2201 = vmatpush1.bf16.msra.mxu0 %v2183
          %2202 = vmatprep.subr.bf16.mxu0 0
          %2203 = vmatpush1.bf16.msra.mxu0 %v2184
          %2204 = vmatprep.subr.bf16.mxu0 0
          %2205 = vmatpush1.bf16.msra.mxu0 %v2185
          %2206 = vmatprep.subr.bf16.mxu0 0
          %2207 = vmatpush1.bf16.msra.mxu0 %v2186
          %2208 = vmatprep.subr.bf16.mxu0 0
          %2209 = vmatpush1.bf16.msra.mxu0 %v2187
          %2210 = vmatprep.subr.bf16.mxu0 0
          %2211 = vmatpush1.bf16.msra.mxu0 %v2188
          %2212 = vmatprep.subr.bf16.mxu0 0
          %2213 = vmatpush1.bf16.msra.mxu0 %v2189
          %2214 = vmatprep.subr.bf16.mxu0 0
          %2215 = vmatpush1.bf16.msra.mxu0 0
          %2216 = vmatprep.subr.bf16.mxu0 0
          %2217 = vmatpush1.bf16.msra.mxu0 0
          %2218 = vmatprep.subr.bf16.mxu0 0
          %2219 = vmatpush1.bf16.msra.mxu0 0
          %2220 = vmatprep.subr.bf16.mxu0 0
          %2221 = vmatpush1.bf16.msra.mxu0 0
          %2222 = vmatprep.subr.bf16.mxu0 0
          %2223 = vmatpush1.bf16.msra.mxu0 0
          %2224 = vmatprep.subr.bf16.mxu0 0
          %2225 = vmatpush1.bf16.msra.mxu0 0
          %2226 = vmatprep.subr.bf16.mxu0 0
          %2227 = vmatpush1.bf16.msra.mxu0 0
          %2228 = vmatprep.subr.bf16.mxu0 0
          %2229 = vmatpush1.bf16.msra.mxu0 0
          %2230 = vmatprep.mubr.bf16.mxu0 0
          %2231 = vmatmul.mubr.bf16.gmra.mrb[0].mxu0 %v2127
          %v2232 = vpop.f32.mrb[0].mxu0
          %v2233 = vadd.f32 %v2149, %v2232
          %v2234 = vpop.f32.mrb[0].mxu0
          %v2235 = vpop.f32.mrb[0].mxu0
          %v2236 = vpop.f32.mrb[0].mxu0
          %2237 = vdwg.mxu0
          %v2238 = vmax.f32 %v2233, 0.0
          %v2239 = vpack.c.bf16 %v2238, %v2238
          %s2240 = scalar_lea.vmem [#allocation9], 448
          %v2241 = vld [vmem:[%s2240] sm:$0xf]
          %v2242 = vld [vmem:[%s2240 + $0x4] sm:$0xf]
          %v2243 = vld [vmem:[%s2240 + $0x8] sm:$0xf]
          %v2244 = vld [vmem:[%s2240 + $0xc] sm:$0xf]
          %v2245 = vld [vmem:[%s2240 + $0x10] sm:$0xf]
          %v2246 = vld [vmem:[%s2240 + $0x14] sm:$0xf]
          %v2247 = vld [vmem:[%s2240 + $0x18] sm:$0xf]
          %v2248 = vld [vmem:[%s2240 + $0x1c] sm:$0xf]
          %v2249 = vld [vmem:[%s2240 + $0x20] sm:$0xf]
          %v2250 = vld [vmem:[%s2240 + $0x24] sm:$0xf]
          %v2251 = vld [vmem:[%s2240 + $0x28] sm:$0xf]
          %v2252 = vld [vmem:[%s2240 + $0x2c] sm:$0xf]
          %v2253 = vld [vmem:[%s2240 + $0x30] sm:$0xf]
          %v2254 = vld [vmem:[%s2240 + $0x34] sm:$0xf]
          %v2255 = vld [vmem:[%s2240 + $0x38] sm:$0xf]
          %v2256 = vld [vmem:[%s2240 + $0x3c] sm:$0xf]
          %v2257 = vld [vmem:[%s6 + $0x7] sm:$0x1]
          %v2258 = vlaneseq
          %v2259 = vshrl.u32 %v2258, 7
          %v2260 = vsub.s32 0, %v2259
          %v2261 = vrot.slane %v2257, %v2260
          %v2278 = vunpack.c.l.b16 %v2241
          %v2279 = vunpack.c.l.b16 %v2242
          %v2280 = vunpack.c.l.b16 %v2243
          %v2281 = vunpack.c.l.b16 %v2244
          %v2282 = vunpack.c.l.b16 %v2245
          %v2283 = vunpack.c.l.b16 %v2246
          %v2284 = vunpack.c.l.b16 %v2247
          %v2285 = vunpack.c.l.b16 %v2248
          %v2286 = vunpack.c.l.b16 %v2249
          %v2287 = vunpack.c.l.b16 %v2250
          %v2288 = vunpack.c.l.b16 %v2251
          %v2289 = vunpack.c.l.b16 %v2252
          %v2290 = vunpack.c.l.b16 %v2253
          %v2291 = vunpack.c.l.b16 %v2254
          %v2292 = vunpack.c.l.b16 %v2255
          %v2293 = vunpack.c.l.b16 %v2256
          %v2294 = vpack.c.b16 %v2279, %v2278
          %v2295 = vpack.c.b16 %v2281, %v2280
          %v2296 = vpack.c.b16 %v2283, %v2282
          %v2297 = vpack.c.b16 %v2285, %v2284
          %v2298 = vpack.c.b16 %v2287, %v2286
          %v2299 = vpack.c.b16 %v2289, %v2288
          %v2300 = vpack.c.b16 %v2291, %v2290
          %v2301 = vpack.c.b16 %v2293, %v2292
          %2310 = vmatprep.subr.bf16.mxu0 0
          %2311 = vmatpush1.bf16.msra.mxu0 %v2294
          %2312 = vmatprep.subr.bf16.mxu0 0
          %2313 = vmatpush1.bf16.msra.mxu0 %v2295
          %2314 = vmatprep.subr.bf16.mxu0 0
          %2315 = vmatpush1.bf16.msra.mxu0 %v2296
          %2316 = vmatprep.subr.bf16.mxu0 0
          %2317 = vmatpush1.bf16.msra.mxu0 %v2297
          %2318 = vmatprep.subr.bf16.mxu0 0
          %2319 = vmatpush1.bf16.msra.mxu0 %v2298
          %2320 = vmatprep.subr.bf16.mxu0 0
          %2321 = vmatpush1.bf16.msra.mxu0 %v2299
          %2322 = vmatprep.subr.bf16.mxu0 0
          %2323 = vmatpush1.bf16.msra.mxu0 %v2300
          %2324 = vmatprep.subr.bf16.mxu0 0
          %2325 = vmatpush1.bf16.msra.mxu0 %v2301
          %2326 = vmatprep.subr.bf16.mxu0 0
          %2327 = vmatpush1.bf16.msra.mxu0 0
          %2328 = vmatprep.subr.bf16.mxu0 0
          %2329 = vmatpush1.bf16.msra.mxu0 0
          %2330 = vmatprep.subr.bf16.mxu0 0
          %2331 = vmatpush1.bf16.msra.mxu0 0
          %2332 = vmatprep.subr.bf16.mxu0 0
          %2333 = vmatpush1.bf16.msra.mxu0 0
          %2334 = vmatprep.subr.bf16.mxu0 0
          %2335 = vmatpush1.bf16.msra.mxu0 0
          %2336 = vmatprep.subr.bf16.mxu0 0
          %2337 = vmatpush1.bf16.msra.mxu0 0
          %2338 = vmatprep.subr.bf16.mxu0 0
          %2339 = vmatpush1.bf16.msra.mxu0 0
          %2340 = vmatprep.subr.bf16.mxu0 0
          %2341 = vmatpush1.bf16.msra.mxu0 0
          %2342 = vmatprep.mubr.bf16.mxu0 0
          %2343 = vmatmul.mubr.bf16.gmra.mrb[0].mxu0 %v2239
          %v2344 = vpop.f32.mrb[0].mxu0
          %v2345 = vadd.f32 %v2261, %v2344
          %v2346 = vpop.f32.mrb[0].mxu0
          %v2347 = vpop.f32.mrb[0].mxu0
          %v2348 = vpop.f32.mrb[0].mxu0
          %2349 = vdwg.mxu0
          %2350 = vst [vmem:[#allocation12] sm:$0x3] %v2345
        $region84: #{tpu_custom_call.1} parent=55 // pred_fallthru
          _
        // Predicated region
        $region85: #{tpu_custom_call.1} parent=55 // pred_check
          %p2351 = pneg %p248
        $region86: #{tpu_custom_call.1} parent=55 // pred_check_branch
          %2353 = sbr.rel (%p2351) target = $region88
        $region87: #{tpu_custom_call.1} parent=55 // pred_region
          %s2355 = ssub.s32 32, 32
          %2356 = vsyncadd [#allocation5], %s2355
          %s2358 = sshll.u32 [#allocation12], 4
          %s2359 = int_to_ptr.vmem [resolvable:$true] %s2358
          %2361 = dma.vmem_to_hbm [thread:$0]  %s2359, 32, %s9, [#allocation5]
        $region88: #{tpu_custom_call.1} parent=55 // pred_fallthru
          _
        // Predicated region
        $region89: #{tpu_custom_call.1} parent=55 // pred_check
          %p2362 = pneg %p269
        $region90: #{tpu_custom_call.1} parent=55 // pred_check_branch
          %2364 = sbr.rel (%p2362) target = $region92
        $region91: #{tpu_custom_call.1} parent=55 // pred_region
          %s2366 = ssub.s32 32, 32
          %2367 = vsyncadd [#allocation14], %s2366
          %s2369 = sshll.u32 [#allocation13], 4
          %s2370 = int_to_ptr.vmem [resolvable:$true] %s2369
          %2372 = dma.vmem_to_hbm [thread:$0]  %s2370, 32, %s10, [#allocation14]
        $region92: #{tpu_custom_call.1} parent=55 // pred_fallthru
          _
        // Predicated region
        $region93: #{tpu_custom_call.1} parent=55 // pred_check
          %p2373 = pneg %p248
        $region94: #{tpu_custom_call.1} parent=55 // pred_check_branch
          %2375 = sbr.rel (%p2373) target = $region96
        $region95: #{tpu_custom_call.1} parent=55 // pred_region
          %2376 = dma.done [#allocation5], 32
        $region96: #{tpu_custom_call.1} parent=55 // pred_fallthru
          _
        // Predicated region
        $region97: #{tpu_custom_call.1} parent=55 // pred_check
          %p2377 = pneg %p269
        $region98: #{tpu_custom_call.1} parent=55 // pred_check_branch
          %2379 = sbr.rel (%p2377) target = $region100
        $region99: #{tpu_custom_call.1} parent=55 // pred_region
          %2380 = dma.done [#allocation14], 32
        $region100: #{tpu_custom_call.1} parent=55 // pred_fallthru
          _
      $region56: #{tpu_custom_call.1} parent=5 // pred_fallthru
        _
      %p2381 = scmp.le.s32.totalorder 2, %s24
      // Predicated region
      $region101: #{tpu_custom_call.1} parent=5 // pred_check
        %p2382 = pneg %p2381
      $region102: #{tpu_custom_call.1} parent=5 // pred_check_branch
        %2384 = sbr.rel (%p2382) target = $region104
      $region103: #{tpu_custom_call.1} parent=5 // pred_region
        %s2385 = ssub.s32 %s24, 2
      $region104: #{tpu_custom_call.1} parent=5 // pred_fallthru
        _
    $region6: #{tpu_custom_call.1} parent=1 // loop_footer
      %s28 = sadd.s32 1, %s24
    $region7: #{tpu_custom_call.1} parent=1 // loop_footer_branch
      %23 = sbr.rel target = $region3
    $region8: #{tpu_custom_call.1} parent=1 // loop_exit
      _
    %2386 = vsyncpa [#allocation4], 1
    %s2387 = scalar_lea.sflag [#allocation4], 1
    %2388 = vsyncpa %s2387, 1
    %2389 = vsyncpa [#allocation7], 1
    %2390 = vsyncpa [#allocation10], 1
    %2391 = vsyncpa [#allocation5], 1
    %s2392 = scalar_lea.sflag [#allocation5], 1
    %2393 = vsyncpa %s2392, 1
    %2394 = vsyncpa [#allocation14], 1

</llo_original>
